<compile_context>
chip_gen: v5e
topology: v5e:2x2
jax: 0.10.0
libtpu: 0.0.40
codegen_flags: <defaults>
</compile_context>

<pallas_src>
import functools
import math

import jax
import jax.numpy as jnp
from jax.experimental import pallas as pl
from jax.experimental.pallas import tpu as pltpu


# ----------------------------- fused stack kernel -----------------------------

def decoder_stack_kernel(x_ref,
                         wq1, wk1, wv1, wo1,
                         wq2, wk2, wv2, wo2,
                         wff1, wff2, bff1_ref, vecs_ref,
                         o_ref,
                         *, n_heads, batch, seq, mm_dtype):
    """One grid step == one DecoderBlock applied to one row tile.

    The activation carry is the (resident) output block o_ref.
    """
    l = pl.program_id(1)

    # Layer 0 of this row tile: bring the input rows into the resident carry.
    @pl.when(l == 0)
    def _init():
        o_ref[...] = x_ref[...]

    x = o_ref[...].astype(jnp.float32)                 # (rows, D)

    # Packed per-layer vectors (loaded once per layer): (16, D)
    vecs = vecs_ref[...]
    bq1, bk1, bv1, bo1 = vecs[0:1], vecs[1:2], vecs[2:3], vecs[3:4]
    bq2, bk2, bv2, bo2 = vecs[4:5], vecs[5:6], vecs[6:7], vecs[7:8]
    bff2 = vecs[8:9]
    g1, be1 = vecs[9:10], vecs[10:11]
    g2, be2 = vecs[11:12], vecs[12:13]
    g3, be3 = vecs[13:14], vecs[14:15]
    bff1 = bff1_ref[...]                               # (1, d_ff)

    D = x.shape[-1]
    df = D // n_heads
    rows = batch * seq
    scale = 1.0 / math.sqrt(df)

    def mm(a, w_ref):
        # lane-dense MXU matmul; operands cast to mm_dtype, f32 accumulation
        return jnp.dot(a.astype(mm_dtype), w_ref[...].astype(mm_dtype),
                       preferred_element_type=jnp.float32)

    def layer_norm(v, g, b, eps=1e-5):
        mu = jnp.mean(v, axis=-1, keepdims=True)
        var = jnp.mean((v - mu) ** 2, axis=-1, keepdims=True)   # biased (torch LN)
        return (v - mu) * jax.lax.rsqrt(var + eps) * g + b

    def mha(xq, xk, xv, wq, wk, wv, wo, bq, bk, bv, bo):
        # fused QKV: one (rows, D) @ (D, D) matmul each (head-major columns)
        q_all = mm(xq, wq) + bq
        k_all = mm(xk, wk) + bk
        v_all = mm(xv, wv) + bv
        heads = []
        for h in range(n_heads):                       # small static unroll
            sl = slice(h * df, (h + 1) * df)
            q3 = q_all[:, sl].reshape(batch, seq, df).astype(mm_dtype)
            k3 = k_all[:, sl].reshape(batch, seq, df).astype(mm_dtype)
            v3 = v_all[:, sl].reshape(batch, seq, df).astype(mm_dtype)
            s = jnp.einsum('bqd,bkd->bqk', q3, k3,
                           preferred_element_type=jnp.float32) * scale
            p = jnp.exp(s)                             # un-stabilized (matches torch ref)
            inv = pl.reciprocal(jnp.sum(p, axis=-1, keepdims=True), approx=False)
            p = p * inv
            oh = jnp.einsum('bqk,bkd->bqd', p.astype(mm_dtype), v3,
                            preferred_element_type=jnp.float32)
            heads.append(oh.reshape(rows, df))
        cat = jnp.concatenate(heads, axis=-1)          # (rows, D), head-major
        # single full-K output projection instead of H partial-K accumulations
        return mm(cat, wo) + bo

    # masked self-attention + residual of LayerNorm(att)
    att1 = mha(x, x, x, wq1, wk1, wv1, wo1, bq1, bk1, bv1, bo1)
    x1 = x + layer_norm(att1, g1, be1)

    # second attention: queries = pre-residual att1, keys/values = x1
    att2 = mha(att1, x1, x1, wq2, wk2, wv2, wo2, bq2, bk2, bv2, bo2)
    x2 = x1 + layer_norm(att2, g2, be2)

    # position-wise feed forward
    hmid = jnp.maximum(mm(x2, wff1) + bff1, 0.0)
    pos = mm(hmid, wff2) + bff2

    new_x = x2 + layer_norm(pos, g3, be3)
    o_ref[...] = new_x.astype(o_ref.dtype)             # carry (resident until r changes)


# ------------------------------- pallas wrapper --------------------------------

def transformer_decoder(x, enc_out, params, *, n_heads, block_batch=None,
                        matmul_dtype=jnp.bfloat16, src_mask=None, tgt_mask=None):
    """Full TransformerDecoder forward as ONE pallas_call, grid=(batch_tiles, layers)."""
    del enc_out, src_mask, tgt_mask   # unused by the reference forward
    B, S, D = x.shape
    L = params[0].shape[0]
    if block_batch is None:
        block_batch = B
    assert B % block_batch == 0
    bt = block_batch
    rows = bt * S
    n_tiles = B // bt
    x2d = x.reshape(B * S, D)         # flatten rows for 2-D lane-dense matmuls

    def layer_spec(a):
        # stacked per-layer array (L, *s): squeeze the layer dim, pick layer l
        nd = a.ndim - 1
        return pl.BlockSpec((None,) + a.shape[1:],
                            lambda r, l, _n=nd: (l,) + (0,) * _n)

    in_specs = ([pl.BlockSpec((rows, D), lambda r, l: (r, 0))]   # x rows for this tile
                + [layer_spec(p) for p in params])
    out_specs = pl.BlockSpec((rows, D), lambda r, l: (r, 0))     # resident carry per tile

    kernel = functools.partial(decoder_stack_kernel, n_heads=n_heads,
                               batch=bt, seq=S, mm_dtype=matmul_dtype)

    y2d = pl.pallas_call(
        kernel,
        out_shape=jax.ShapeDtypeStruct((B * S, D), x.dtype),
        grid=(n_tiles, L),
        in_specs=in_specs,
        out_specs=out_specs,
        compiler_params=pltpu.CompilerParams(
            dimension_semantics=("parallel", "arbitrary"),
            vmem_limit_bytes=48 * 1024 * 1024),
    )(x2d, *params)
    return y2d.reshape(B, S, D)


# ---------------------------- parameter construction ---------------------------

# packed per-layer (1, D) vector order:
#   0..3  : bq1, bk1, bv1, bo1        4..7 : bq2, bk2, bv2, bo2
#   8     : bff2                      9..14: g1, be1, g2, be2, g3, be3
#   15    : padding (zeros)
def init_params(key, n_layers, d_model, d_ff, n_heads, scale=0.05):
    assert d_model % n_heads == 0
    keys = iter(jax.random.split(key, 24))

    def nrm(shape):
        return scale * jax.random.normal(next(keys), shape, jnp.float32)

    # fused attention weights: (L, D, D), output columns laid out head-major
    wq1, wk1, wv1, wo1 = (nrm((n_layers, d_model, d_model)) for _ in range(4))
    wq2, wk2, wv2, wo2 = (nrm((n_layers, d_model, d_model)) for _ in range(4))
    wff1 = nrm((n_layers, d_model, d_ff))
    wff2 = nrm((n_layers, d_ff, d_model))
    bff1 = nrm((n_layers, 1, d_ff))

    bias_rows = [nrm((n_layers, d_model)) for _ in range(9)]    # bq/bk/bv/bo x2, bff2
    ln_rows = []
    for _ in range(3):
        ln_rows += [jnp.ones((n_layers, d_model), jnp.float32),
                    jnp.zeros((n_layers, d_model), jnp.float32)]
    pad = [jnp.zeros((n_layers, d_model), jnp.float32)]
    vecs = jnp.stack(bias_rows + ln_rows + pad, axis=1)         # (L, 16, D)

    return (wq1, wk1, wv1, wo1, wq2, wk2, wv2, wo2, wff1, wff2, bff1, vecs)


# ------------------------------- pure-JAX reference ----------------------------

def _ref_forward(x, params, n_heads):
    (wq1, wk1, wv1, wo1, wq2, wk2, wv2, wo2, wff1, wff2, bff1, vecs) = params
    L, D, _ = wq1.shape
    df = D // n_heads

    def ln(v, g, b, eps=1e-5):
        mu = v.mean(-1, keepdims=True)
        var = ((v - mu) ** 2).mean(-1, keepdims=True)
        return (v - mu) * jax.lax.rsqrt(var + eps) * g + b

    def mha(xq, xk, xv, wq, wk, wv, wo, bq, bk, bv, bo):
        Q = xq @ wq + bq
        K = xk @ wk + bk
        V = xv @ wv + bv
        outs = []
        for h in range(n_heads):
            sl = slice(h * df, (h + 1) * df)
            attn = jnp.exp(jnp.einsum('bqd,bkd->bqk', Q[..., sl], K[..., sl])
                           / math.sqrt(df))
            attn = attn / attn.sum(-1, keepdims=True)
            outs.append(jnp.einsum('bqk,bkd->bqd', attn, V[..., sl]))
        cat = jnp.concatenate(outs, axis=-1)
        return cat @ wo + bo

    for l in range(L):
        v = vecs[l]
        (bq1, bk1, bv1, bo1, bq2, bk2, bv2, bo2, bff2,
         g1, be1, g2, be2, g3, be3) = [v[i:i + 1] for i in range(15)]
        att1 = mha(x, x, x, wq1[l], wk1[l], wv1[l], wo1[l], bq1, bk1, bv1, bo1)
        x1 = x + ln(att1, g1, be1)
        att2 = mha(att1, x1, x1, wq2[l], wk2[l], wv2[l], wo2[l], bq2, bk2, bv2, bo2)
        x2 = x1 + ln(att2, g2, be2)
        pos = jnp.maximum(x2 @ wff1[l] + bff1[l], 0.0) @ wff2[l] + bff2
        x = x2 + ln(pos, g3, be3)
    return x


# ------------------------------------- main -------------------------------------

if __name__ == "__main__":
    # small, DecoderBlock-consistent shapes: d_model = d_feature * n_heads
    n_blocks, d_model, n_heads, d_ff = 2, 32, 4, 64
    batch, seq = 2, 8

    key = jax.random.PRNGKey(0)
    kx, ke, kp = jax.random.split(key, 3)
    x = jax.random.normal(kx, (batch, seq, d_model), jnp.float32)
    enc_out = jax.random.normal(ke, (batch, seq, d_model), jnp.float32)  # unused by forward

    params = init_params(kp, n_blocks, d_model, d_ff, n_heads)
    ref = _ref_forward(x, params, n_heads)

    # 1) exact-parity run: f32 matmuls, tight tolerance vs. the f32 reference
    out_f32 = transformer_decoder(x, enc_out, params, n_heads=n_heads,
                                  matmul_dtype=jnp.float32, block_batch=1)
    out_f32 = jax.block_until_ready(out_f32)
    assert out_f32.shape == (batch, seq, d_model)
    assert jnp.allclose(out_f32, ref, atol=1e-3, rtol=1e-3), "f32 mismatch vs reference"

    # 2) perf path: bf16 MXU operands, f32 accumulation / softmax / LayerNorm
    out_bf16 = transformer_decoder(x, enc_out, params, n_heads=n_heads,
                                   matmul_dtype=jnp.bfloat16, block_batch=1)
    out_bf16 = jax.block_until_ready(out_bf16)
    assert jnp.allclose(out_bf16, ref, atol=5e-2, rtol=5e-2), "bf16 mismatch vs reference"

    print("KERNEL_OK")
</pallas_src>

<mosaic_0001>
module attributes {stable_mosaic.version = 11 : i64} {
  func.func @decoder_stack_kernel(%arg0: i32, %arg1: i32, %arg2: memref<8x32xf32, #tpu.memory_space<vmem>>, %arg3: memref<1x32x32xf32, #tpu.memory_space<vmem>>, %arg4: memref<1x32x32xf32, #tpu.memory_space<vmem>>, %arg5: memref<1x32x32xf32, #tpu.memory_space<vmem>>, %arg6: memref<1x32x32xf32, #tpu.memory_space<vmem>>, %arg7: memref<1x32x32xf32, #tpu.memory_space<vmem>>, %arg8: memref<1x32x32xf32, #tpu.memory_space<vmem>>, %arg9: memref<1x32x32xf32, #tpu.memory_space<vmem>>, %arg10: memref<1x32x32xf32, #tpu.memory_space<vmem>>, %arg11: memref<1x32x64xf32, #tpu.memory_space<vmem>>, %arg12: memref<1x64x32xf32, #tpu.memory_space<vmem>>, %arg13: memref<1x1x64xf32, #tpu.memory_space<vmem>>, %arg14: memref<1x16x32xf32, #tpu.memory_space<vmem>>, %arg15: memref<8x32xf32, #tpu.memory_space<vmem>>) attributes {dimension_semantics = [#tpu.dimension_semantics<parallel>, #tpu.dimension_semantics<arbitrary>], iteration_bounds = array<i64: 2, 2>, scalar_prefetch = 0 : i64, scratch_operands = 0 : i64, tpu.core_type = #tpu.core_type<tc>, window_params = [{transform_indices = @transform_0, window_bounds = array<i64: 8, 32>}, {transform_indices = @transform_1, window_bounds = array<i64: 1, 32, 32>}, {transform_indices = @transform_2, window_bounds = array<i64: 1, 32, 32>}, {transform_indices = @transform_3, window_bounds = array<i64: 1, 32, 32>}, {transform_indices = @transform_4, window_bounds = array<i64: 1, 32, 32>}, {transform_indices = @transform_5, window_bounds = array<i64: 1, 32, 32>}, {transform_indices = @transform_6, window_bounds = array<i64: 1, 32, 32>}, {transform_indices = @transform_7, window_bounds = array<i64: 1, 32, 32>}, {transform_indices = @transform_8, window_bounds = array<i64: 1, 32, 32>}, {transform_indices = @transform_9, window_bounds = array<i64: 1, 32, 64>}, {transform_indices = @transform_10, window_bounds = array<i64: 1, 64, 32>}, {transform_indices = @transform_11, window_bounds = array<i64: 1, 1, 64>}, {transform_indices = @transform_12, window_bounds = array<i64: 1, 16, 32>}, {transform_indices = @transform_13, window_bounds = array<i64: 8, 32>}]} {
    %c0_i32 = arith.constant 0 : i32
    %0 = arith.cmpi eq, %arg1, %c0_i32 : i32
    %1 = arith.extui %0 : i1 to i32
    %c0_i32_0 = arith.constant 0 : i32
    %2 = arith.cmpi ne, %1, %c0_i32_0 : i32
    scf.if %2 {
      %c0_97 = arith.constant 0 : index
      %c0_98 = arith.constant 0 : index
      %283 = vector.load %arg2[%c0_97, %c0_98] : memref<8x32xf32, #tpu.memory_space<vmem>>, vector<8x32xf32>
      %c0_99 = arith.constant 0 : index
      %c0_100 = arith.constant 0 : index
      %284 = vector.load %arg15[%c0_99, %c0_100] : memref<8x32xf32, #tpu.memory_space<vmem>>, vector<8x32xf32>
      tpu.vector_store %arg15[%c0_99, %c0_100], %283 {strides = array<i32>} : memref<8x32xf32, #tpu.memory_space<vmem>>, vector<8x32xf32>,
    } else {
    }
    %c0 = arith.constant 0 : index
    %c0_1 = arith.constant 0 : index
    %3 = vector.load %arg15[%c0, %c0_1] : memref<8x32xf32, #tpu.memory_space<vmem>>, vector<8x32xf32>
    %c0_2 = arith.constant 0 : index
    %c0_3 = arith.constant 0 : index
    %c0_4 = arith.constant 0 : index
    %4 = vector.load %arg14[%c0_2, %c0_3, %c0_4] : memref<1x16x32xf32, #tpu.memory_space<vmem>>, vector<1x16x32xf32>
    %5 = vector.shape_cast %4 : vector<1x16x32xf32> to vector<16x32xf32>
    %6 = vector.extract_strided_slice %5 {offsets = [0, 0], sizes = [1, 32], strides = [1, 1]} : vector<16x32xf32> to vector<1x32xf32>
    %7 = vector.extract_strided_slice %5 {offsets = [1, 0], sizes = [1, 32], strides = [1, 1]} : vector<16x32xf32> to vector<1x32xf32>
    %8 = vector.extract_strided_slice %5 {offsets = [2, 0], sizes = [1, 32], strides = [1, 1]} : vector<16x32xf32> to vector<1x32xf32>
    %9 = vector.extract_strided_slice %5 {offsets = [3, 0], sizes = [1, 32], strides = [1, 1]} : vector<16x32xf32> to vector<1x32xf32>
    %10 = vector.extract_strided_slice %5 {offsets = [4, 0], sizes = [1, 32], strides = [1, 1]} : vector<16x32xf32> to vector<1x32xf32>
    %11 = vector.extract_strided_slice %5 {offsets = [5, 0], sizes = [1, 32], strides = [1, 1]} : vector<16x32xf32> to vector<1x32xf32>
    %12 = vector.extract_strided_slice %5 {offsets = [6, 0], sizes = [1, 32], strides = [1, 1]} : vector<16x32xf32> to vector<1x32xf32>
    %13 = vector.extract_strided_slice %5 {offsets = [7, 0], sizes = [1, 32], strides = [1, 1]} : vector<16x32xf32> to vector<1x32xf32>
    %14 = vector.extract_strided_slice %5 {offsets = [8, 0], sizes = [1, 32], strides = [1, 1]} : vector<16x32xf32> to vector<1x32xf32>
    %15 = vector.extract_strided_slice %5 {offsets = [9, 0], sizes = [1, 32], strides = [1, 1]} : vector<16x32xf32> to vector<1x32xf32>
    %16 = vector.extract_strided_slice %5 {offsets = [10, 0], sizes = [1, 32], strides = [1, 1]} : vector<16x32xf32> to vector<1x32xf32>
    %17 = vector.extract_strided_slice %5 {offsets = [11, 0], sizes = [1, 32], strides = [1, 1]} : vector<16x32xf32> to vector<1x32xf32>
    %18 = vector.extract_strided_slice %5 {offsets = [12, 0], sizes = [1, 32], strides = [1, 1]} : vector<16x32xf32> to vector<1x32xf32>
    %19 = vector.extract_strided_slice %5 {offsets = [13, 0], sizes = [1, 32], strides = [1, 1]} : vector<16x32xf32> to vector<1x32xf32>
    %20 = vector.extract_strided_slice %5 {offsets = [14, 0], sizes = [1, 32], strides = [1, 1]} : vector<16x32xf32> to vector<1x32xf32>
    %c0_5 = arith.constant 0 : index
    %c0_6 = arith.constant 0 : index
    %c0_7 = arith.constant 0 : index
    %21 = vector.load %arg13[%c0_5, %c0_6, %c0_7] : memref<1x1x64xf32, #tpu.memory_space<vmem>>, vector<1x1x64xf32>
    %22 = vector.shape_cast %21 : vector<1x1x64xf32> to vector<1x64xf32>
    %c0_8 = arith.constant 0 : index
    %c0_9 = arith.constant 0 : index
    %c0_10 = arith.constant 0 : index
    %23 = vector.load %arg3[%c0_8, %c0_9, %c0_10] : memref<1x32x32xf32, #tpu.memory_space<vmem>>, vector<1x32x32xf32>
    %24 = vector.shape_cast %23 : vector<1x32x32xf32> to vector<32x32xf32>
    %cst = arith.constant dense<0.000000e+00> : vector<8x32xf32>
    %25 = tpu.matmul %3, %24, %cst {dimension_numbers = #tpu.dot_dimension_numbers<[1], [0], [0], [1], [0, 0, 1, 1], [], []>} : vector<8x32xf32>, vector<32x32xf32>, vector<8x32xf32> -> vector<8x32xf32>
    %26 = vector.broadcast %6 : vector<1x32xf32> to vector<8x32xf32>
    %27 = arith.addf %25, %26 : vector<8x32xf32>
    %c0_11 = arith.constant 0 : index
    %c0_12 = arith.constant 0 : index
    %c0_13 = arith.constant 0 : index
    %28 = vector.load %arg4[%c0_11, %c0_12, %c0_13] : memref<1x32x32xf32, #tpu.memory_space<vmem>>, vector<1x32x32xf32>
    %29 = vector.shape_cast %28 : vector<1x32x32xf32> to vector<32x32xf32>
    %cst_14 = arith.constant dense<0.000000e+00> : vector<8x32xf32>
    %30 = tpu.matmul %3, %29, %cst_14 {dimension_numbers = #tpu.dot_dimension_numbers<[1], [0], [0], [1], [0, 0, 1, 1], [], []>} : vector<8x32xf32>, vector<32x32xf32>, vector<8x32xf32> -> vector<8x32xf32>
    %31 = vector.broadcast %7 : vector<1x32xf32> to vector<8x32xf32>
    %32 = arith.addf %30, %31 : vector<8x32xf32>
    %c0_15 = arith.constant 0 : index
    %c0_16 = arith.constant 0 : index
    %c0_17 = arith.constant 0 : index
    %33 = vector.load %arg5[%c0_15, %c0_16, %c0_17] : memref<1x32x32xf32, #tpu.memory_space<vmem>>, vector<1x32x32xf32>
    %34 = vector.shape_cast %33 : vector<1x32x32xf32> to vector<32x32xf32>
    %cst_18 = arith.constant dense<0.000000e+00> : vector<8x32xf32>
    %35 = tpu.matmul %3, %34, %cst_18 {dimension_numbers = #tpu.dot_dimension_numbers<[1], [0], [0], [1], [0, 0, 1, 1], [], []>} : vector<8x32xf32>, vector<32x32xf32>, vector<8x32xf32> -> vector<8x32xf32>
    %36 = vector.broadcast %8 : vector<1x32xf32> to vector<8x32xf32>
    %37 = arith.addf %35, %36 : vector<8x32xf32>
    %38 = vector.extract_strided_slice %27 {offsets = [0, 0], sizes = [8, 8], strides = [1, 1]} : vector<8x32xf32> to vector<8x8xf32>
    %39 = vector.shape_cast %38 : vector<8x8xf32> to vector<1x8x8xf32>
    %40 = vector.extract_strided_slice %32 {offsets = [0, 0], sizes = [8, 8], strides = [1, 1]} : vector<8x32xf32> to vector<8x8xf32>
    %41 = vector.shape_cast %40 : vector<8x8xf32> to vector<1x8x8xf32>
    %42 = vector.extract_strided_slice %37 {offsets = [0, 0], sizes = [8, 8], strides = [1, 1]} : vector<8x32xf32> to vector<8x8xf32>
    %43 = vector.shape_cast %42 : vector<8x8xf32> to vector<1x8x8xf32>
    "tpu.trace_start"() <{level = 10 : i32, message = "bqd,bkd->bqk"}> : () -> ()
    %cst_19 = arith.constant dense<0.000000e+00> : vector<1x8x8xf32>
    %44 = tpu.matmul %39, %41, %cst_19 {dimension_numbers = #tpu.dot_dimension_numbers<[2], [2], [1], [1], [0, 0, 0, 1, 1, 1], [0], [0]>} : vector<1x8x8xf32>, vector<1x8x8xf32>, vector<1x8x8xf32> -> vector<1x8x8xf32>
    "tpu.trace_stop"() : () -> ()
    %cst_20 = arith.constant 0.353553385 : f32
    %45 = vector.broadcast %cst_20 : f32 to vector<1x8x8xf32>
    %46 = arith.mulf %44, %45 : vector<1x8x8xf32>
    %47 = math.exp %46 : vector<1x8x8xf32>
    %cst_21 = arith.constant dense<0.000000e+00> : vector<1x8xf32>
    %48 = vector.multi_reduction <add>, %47, %cst_21 [2] : vector<1x8x8xf32> to vector<1x8xf32>
    %49 = vector.shape_cast %48 : vector<1x8xf32> to vector<1x8x1xf32>
    %50 = tpu.reciprocal %49 : vector<1x8x1xf32> -> vector<1x8x1xf32>
    %51 = vector.broadcast %50 : vector<1x8x1xf32> to vector<1x8x8xf32>
    %52 = arith.mulf %47, %51 : vector<1x8x8xf32>
    "tpu.trace_start"() <{level = 10 : i32, message = "bqk,bkd->bqd"}> : () -> ()
    %cst_22 = arith.constant dense<0.000000e+00> : vector<1x8x8xf32>
    %53 = tpu.matmul %52, %43, %cst_22 {dimension_numbers = #tpu.dot_dimension_numbers<[2], [1], [1], [2], [0, 0, 0, 1, 1, 2], [0], [0]>} : vector<1x8x8xf32>, vector<1x8x8xf32>, vector<1x8x8xf32> -> vector<1x8x8xf32>
    "tpu.trace_stop"() : () -> ()
    %54 = vector.shape_cast %53 : vector<1x8x8xf32> to vector<8x8xf32>
    %55 = vector.extract_strided_slice %27 {offsets = [0, 8], sizes = [8, 8], strides = [1, 1]} : vector<8x32xf32> to vector<8x8xf32>
    %56 = vector.shape_cast %55 : vector<8x8xf32> to vector<1x8x8xf32>
    %57 = vector.extract_strided_slice %32 {offsets = [0, 8], sizes = [8, 8], strides = [1, 1]} : vector<8x32xf32> to vector<8x8xf32>
    %58 = vector.shape_cast %57 : vector<8x8xf32> to vector<1x8x8xf32>
    %59 = vector.extract_strided_slice %37 {offsets = [0, 8], sizes = [8, 8], strides = [1, 1]} : vector<8x32xf32> to vector<8x8xf32>
    %60 = vector.shape_cast %59 : vector<8x8xf32> to vector<1x8x8xf32>
    "tpu.trace_start"() <{level = 10 : i32, message = "bqd,bkd->bqk"}> : () -> ()
    %cst_23 = arith.constant dense<0.000000e+00> : vector<1x8x8xf32>
    %61 = tpu.matmul %56, %58, %cst_23 {dimension_numbers = #tpu.dot_dimension_numbers<[2], [2], [1], [1], [0, 0, 0, 1, 1, 1], [0], [0]>} : vector<1x8x8xf32>, vector<1x8x8xf32>, vector<1x8x8xf32> -> vector<1x8x8xf32>
    "tpu.trace_stop"() : () -> ()
    %cst_24 = arith.constant 0.353553385 : f32
    %62 = vector.broadcast %cst_24 : f32 to vector<1x8x8xf32>
    %63 = arith.mulf %61, %62 : vector<1x8x8xf32>
    %64 = math.exp %63 : vector<1x8x8xf32>
    %cst_25 = arith.constant dense<0.000000e+00> : vector<1x8xf32>
    %65 = vector.multi_reduction <add>, %64, %cst_25 [2] : vector<1x8x8xf32> to vector<1x8xf32>
    %66 = vector.shape_cast %65 : vector<1x8xf32> to vector<1x8x1xf32>
    %67 = tpu.reciprocal %66 : vector<1x8x1xf32> -> vector<1x8x1xf32>
    %68 = vector.broadcast %67 : vector<1x8x1xf32> to vector<1x8x8xf32>
    %69 = arith.mulf %64, %68 : vector<1x8x8xf32>
    "tpu.trace_start"() <{level = 10 : i32, message = "bqk,bkd->bqd"}> : () -> ()
    %cst_26 = arith.constant dense<0.000000e+00> : vector<1x8x8xf32>
    %70 = tpu.matmul %69, %60, %cst_26 {dimension_numbers = #tpu.dot_dimension_numbers<[2], [1], [1], [2], [0, 0, 0, 1, 1, 2], [0], [0]>} : vector<1x8x8xf32>, vector<1x8x8xf32>, vector<1x8x8xf32> -> vector<1x8x8xf32>
    "tpu.trace_stop"() : () -> ()
    %71 = vector.shape_cast %70 : vector<1x8x8xf32> to vector<8x8xf32>
    %72 = vector.extract_strided_slice %27 {offsets = [0, 16], sizes = [8, 8], strides = [1, 1]} : vector<8x32xf32> to vector<8x8xf32>
    %73 = vector.shape_cast %72 : vector<8x8xf32> to vector<1x8x8xf32>
    %74 = vector.extract_strided_slice %32 {offsets = [0, 16], sizes = [8, 8], strides = [1, 1]} : vector<8x32xf32> to vector<8x8xf32>
    %75 = vector.shape_cast %74 : vector<8x8xf32> to vector<1x8x8xf32>
    %76 = vector.extract_strided_slice %37 {offsets = [0, 16], sizes = [8, 8], strides = [1, 1]} : vector<8x32xf32> to vector<8x8xf32>
    %77 = vector.shape_cast %76 : vector<8x8xf32> to vector<1x8x8xf32>
    "tpu.trace_start"() <{level = 10 : i32, message = "bqd,bkd->bqk"}> : () -> ()
    %cst_27 = arith.constant dense<0.000000e+00> : vector<1x8x8xf32>
    %78 = tpu.matmul %73, %75, %cst_27 {dimension_numbers = #tpu.dot_dimension_numbers<[2], [2], [1], [1], [0, 0, 0, 1, 1, 1], [0], [0]>} : vector<1x8x8xf32>, vector<1x8x8xf32>, vector<1x8x8xf32> -> vector<1x8x8xf32>
    "tpu.trace_stop"() : () -> ()
    %cst_28 = arith.constant 0.353553385 : f32
    %79 = vector.broadcast %cst_28 : f32 to vector<1x8x8xf32>
    %80 = arith.mulf %78, %79 : vector<1x8x8xf32>
    %81 = math.exp %80 : vector<1x8x8xf32>
    %cst_29 = arith.constant dense<0.000000e+00> : vector<1x8xf32>
    %82 = vector.multi_reduction <add>, %81, %cst_29 [2] : vector<1x8x8xf32> to vector<1x8xf32>
    %83 = vector.shape_cast %82 : vector<1x8xf32> to vector<1x8x1xf32>
    %84 = tpu.reciprocal %83 : vector<1x8x1xf32> -> vector<1x8x1xf32>
    %85 = vector.broadcast %84 : vector<1x8x1xf32> to vector<1x8x8xf32>
    %86 = arith.mulf %81, %85 : vector<1x8x8xf32>
    "tpu.trace_start"() <{level = 10 : i32, message = "bqk,bkd->bqd"}> : () -> ()
    %cst_30 = arith.constant dense<0.000000e+00> : vector<1x8x8xf32>
    %87 = tpu.matmul %86, %77, %cst_30 {dimension_numbers = #tpu.dot_dimension_numbers<[2], [1], [1], [2], [0, 0, 0, 1, 1, 2], [0], [0]>} : vector<1x8x8xf32>, vector<1x8x8xf32>, vector<1x8x8xf32> -> vector<1x8x8xf32>
    "tpu.trace_stop"() : () -> ()
    %88 = vector.shape_cast %87 : vector<1x8x8xf32> to vector<8x8xf32>
    %89 = vector.extract_strided_slice %27 {offsets = [0, 24], sizes = [8, 8], strides = [1, 1]} : vector<8x32xf32> to vector<8x8xf32>
    %90 = vector.shape_cast %89 : vector<8x8xf32> to vector<1x8x8xf32>
    %91 = vector.extract_strided_slice %32 {offsets = [0, 24], sizes = [8, 8], strides = [1, 1]} : vector<8x32xf32> to vector<8x8xf32>
    %92 = vector.shape_cast %91 : vector<8x8xf32> to vector<1x8x8xf32>
    %93 = vector.extract_strided_slice %37 {offsets = [0, 24], sizes = [8, 8], strides = [1, 1]} : vector<8x32xf32> to vector<8x8xf32>
    %94 = vector.shape_cast %93 : vector<8x8xf32> to vector<1x8x8xf32>
    "tpu.trace_start"() <{level = 10 : i32, message = "bqd,bkd->bqk"}> : () -> ()
    %cst_31 = arith.constant dense<0.000000e+00> : vector<1x8x8xf32>
    %95 = tpu.matmul %90, %92, %cst_31 {dimension_numbers = #tpu.dot_dimension_numbers<[2], [2], [1], [1], [0, 0, 0, 1, 1, 1], [0], [0]>} : vector<1x8x8xf32>, vector<1x8x8xf32>, vector<1x8x8xf32> -> vector<1x8x8xf32>
    "tpu.trace_stop"() : () -> ()
    %cst_32 = arith.constant 0.353553385 : f32
    %96 = vector.broadcast %cst_32 : f32 to vector<1x8x8xf32>
    %97 = arith.mulf %95, %96 : vector<1x8x8xf32>
    %98 = math.exp %97 : vector<1x8x8xf32>
    %cst_33 = arith.constant dense<0.000000e+00> : vector<1x8xf32>
    %99 = vector.multi_reduction <add>, %98, %cst_33 [2] : vector<1x8x8xf32> to vector<1x8xf32>
    %100 = vector.shape_cast %99 : vector<1x8xf32> to vector<1x8x1xf32>
    %101 = tpu.reciprocal %100 : vector<1x8x1xf32> -> vector<1x8x1xf32>
    %102 = vector.broadcast %101 : vector<1x8x1xf32> to vector<1x8x8xf32>
    %103 = arith.mulf %98, %102 : vector<1x8x8xf32>
    "tpu.trace_start"() <{level = 10 : i32, message = "bqk,bkd->bqd"}> : () -> ()
    %cst_34 = arith.constant dense<0.000000e+00> : vector<1x8x8xf32>
    %104 = tpu.matmul %103, %94, %cst_34 {dimension_numbers = #tpu.dot_dimension_numbers<[2], [1], [1], [2], [0, 0, 0, 1, 1, 2], [0], [0]>} : vector<1x8x8xf32>, vector<1x8x8xf32>, vector<1x8x8xf32> -> vector<1x8x8xf32>
    "tpu.trace_stop"() : () -> ()
    %105 = vector.shape_cast %104 : vector<1x8x8xf32> to vector<8x8xf32>
    %106 = tpu.concatenate %54, %71, %88, %105 in 1 : vector<8x8xf32>, vector<8x8xf32>, vector<8x8xf32>, vector<8x8xf32> -> vector<8x32xf32>
    %c0_35 = arith.constant 0 : index
    %c0_36 = arith.constant 0 : index
    %c0_37 = arith.constant 0 : index
    %107 = vector.load %arg6[%c0_35, %c0_36, %c0_37] : memref<1x32x32xf32, #tpu.memory_space<vmem>>, vector<1x32x32xf32>
    %108 = vector.shape_cast %107 : vector<1x32x32xf32> to vector<32x32xf32>
    %cst_38 = arith.constant dense<0.000000e+00> : vector<8x32xf32>
    %109 = tpu.matmul %106, %108, %cst_38 {dimension_numbers = #tpu.dot_dimension_numbers<[1], [0], [0], [1], [0, 0, 1, 1], [], []>} : vector<8x32xf32>, vector<32x32xf32>, vector<8x32xf32> -> vector<8x32xf32>
    %110 = vector.broadcast %9 : vector<1x32xf32> to vector<8x32xf32>
    %111 = arith.addf %109, %110 : vector<8x32xf32>
    %cst_39 = arith.constant dense<0.000000e+00> : vector<8xf32>
    %112 = vector.multi_reduction <add>, %111, %cst_39 [1] : vector<8x32xf32> to vector<8xf32>
    %113 = vector.shape_cast %112 : vector<8xf32> to vector<8x1xf32>
    %cst_40 = arith.constant 3.200000e+01 : f32
    %114 = vector.broadcast %cst_40 : f32 to vector<8x1xf32>
    %115 = arith.divf %113, %114 : vector<8x1xf32>
    %116 = vector.broadcast %115 : vector<8x1xf32> to vector<8x32xf32>
    %117 = arith.subf %111, %116 : vector<8x32xf32>
    %118 = arith.mulf %117, %117 : vector<8x32xf32>
    %cst_41 = arith.constant dense<0.000000e+00> : vector<8xf32>
    %119 = vector.multi_reduction <add>, %118, %cst_41 [1] : vector<8x32xf32> to vector<8xf32>
    %120 = vector.shape_cast %119 : vector<8xf32> to vector<8x1xf32>
    %cst_42 = arith.constant 3.200000e+01 : f32
    %121 = vector.broadcast %cst_42 : f32 to vector<8x1xf32>
    %122 = arith.divf %120, %121 : vector<8x1xf32>
    %123 = vector.broadcast %115 : vector<8x1xf32> to vector<8x32xf32>
    %124 = arith.subf %111, %123 : vector<8x32xf32>
    %cst_43 = arith.constant 9.99999974E-6 : f32
    %125 = vector.broadcast %cst_43 : f32 to vector<8x1xf32>
    %126 = arith.addf %122, %125 : vector<8x1xf32>
    %127 = math.rsqrt %126 : vector<8x1xf32>
    %128 = vector.broadcast %127 : vector<8x1xf32> to vector<8x32xf32>
    %129 = arith.mulf %124, %128 : vector<8x32xf32>
    %130 = vector.broadcast %15 : vector<1x32xf32> to vector<8x32xf32>
    %131 = arith.mulf %129, %130 : vector<8x32xf32>
    %132 = vector.broadcast %16 : vector<1x32xf32> to vector<8x32xf32>
    %133 = arith.addf %131, %132 : vector<8x32xf32>
    %134 = arith.addf %3, %133 : vector<8x32xf32>
    %c0_44 = arith.constant 0 : index
    %c0_45 = arith.constant 0 : index
    %c0_46 = arith.constant 0 : index
    %135 = vector.load %arg7[%c0_44, %c0_45, %c0_46] : memref<1x32x32xf32, #tpu.memory_space<vmem>>, vector<1x32x32xf32>
    %136 = vector.shape_cast %135 : vector<1x32x32xf32> to vector<32x32xf32>
    %cst_47 = arith.constant dense<0.000000e+00> : vector<8x32xf32>
    %137 = tpu.matmul %111, %136, %cst_47 {dimension_numbers = #tpu.dot_dimension_numbers<[1], [0], [0], [1], [0, 0, 1, 1], [], []>} : vector<8x32xf32>, vector<32x32xf32>, vector<8x32xf32> -> vector<8x32xf32>
    %138 = vector.broadcast %10 : vector<1x32xf32> to vector<8x32xf32>
    %139 = arith.addf %137, %138 : vector<8x32xf32>
    %c0_48 = arith.constant 0 : index
    %c0_49 = arith.constant 0 : index
    %c0_50 = arith.constant 0 : index
    %140 = vector.load %arg8[%c0_48, %c0_49, %c0_50] : memref<1x32x32xf32, #tpu.memory_space<vmem>>, vector<1x32x32xf32>
    %141 = vector.shape_cast %140 : vector<1x32x32xf32> to vector<32x32xf32>
    %cst_51 = arith.constant dense<0.000000e+00> : vector<8x32xf32>
    %142 = tpu.matmul %134, %141, %cst_51 {dimension_numbers = #tpu.dot_dimension_numbers<[1], [0], [0], [1], [0, 0, 1, 1], [], []>} : vector<8x32xf32>, vector<32x32xf32>, vector<8x32xf32> -> vector<8x32xf32>
    %143 = vector.broadcast %11 : vector<1x32xf32> to vector<8x32xf32>
    %144 = arith.addf %142, %143 : vector<8x32xf32>
    %c0_52 = arith.constant 0 : index
    %c0_53 = arith.constant 0 : index
    %c0_54 = arith.constant 0 : index
    %145 = vector.load %arg9[%c0_52, %c0_53, %c0_54] : memref<1x32x32xf32, #tpu.memory_space<vmem>>, vector<1x32x32xf32>
    %146 = vector.shape_cast %145 : vector<1x32x32xf32> to vector<32x32xf32>
    %cst_55 = arith.constant dense<0.000000e+00> : vector<8x32xf32>
    %147 = tpu.matmul %134, %146, %cst_55 {dimension_numbers = #tpu.dot_dimension_numbers<[1], [0], [0], [1], [0, 0, 1, 1], [], []>} : vector<8x32xf32>, vector<32x32xf32>, vector<8x32xf32> -> vector<8x32xf32>
    %148 = vector.broadcast %12 : vector<1x32xf32> to vector<8x32xf32>
    %149 = arith.addf %147, %148 : vector<8x32xf32>
    %150 = vector.extract_strided_slice %139 {offsets = [0, 0], sizes = [8, 8], strides = [1, 1]} : vector<8x32xf32> to vector<8x8xf32>
    %151 = vector.shape_cast %150 : vector<8x8xf32> to vector<1x8x8xf32>
    %152 = vector.extract_strided_slice %144 {offsets = [0, 0], sizes = [8, 8], strides = [1, 1]} : vector<8x32xf32> to vector<8x8xf32>
    %153 = vector.shape_cast %152 : vector<8x8xf32> to vector<1x8x8xf32>
    %154 = vector.extract_strided_slice %149 {offsets = [0, 0], sizes = [8, 8], strides = [1, 1]} : vector<8x32xf32> to vector<8x8xf32>
    %155 = vector.shape_cast %154 : vector<8x8xf32> to vector<1x8x8xf32>
    "tpu.trace_start"() <{level = 10 : i32, message = "bqd,bkd->bqk"}> : () -> ()
    %cst_56 = arith.constant dense<0.000000e+00> : vector<1x8x8xf32>
    %156 = tpu.matmul %151, %153, %cst_56 {dimension_numbers = #tpu.dot_dimension_numbers<[2], [2], [1], [1], [0, 0, 0, 1, 1, 1], [0], [0]>} : vector<1x8x8xf32>, vector<1x8x8xf32>, vector<1x8x8xf32> -> vector<1x8x8xf32>
    "tpu.trace_stop"() : () -> ()
    %cst_57 = arith.constant 0.353553385 : f32
    %157 = vector.broadcast %cst_57 : f32 to vector<1x8x8xf32>
    %158 = arith.mulf %156, %157 : vector<1x8x8xf32>
    %159 = math.exp %158 : vector<1x8x8xf32>
    %cst_58 = arith.constant dense<0.000000e+00> : vector<1x8xf32>
    %160 = vector.multi_reduction <add>, %159, %cst_58 [2] : vector<1x8x8xf32> to vector<1x8xf32>
    %161 = vector.shape_cast %160 : vector<1x8xf32> to vector<1x8x1xf32>
    %162 = tpu.reciprocal %161 : vector<1x8x1xf32> -> vector<1x8x1xf32>
    %163 = vector.broadcast %162 : vector<1x8x1xf32> to vector<1x8x8xf32>
    %164 = arith.mulf %159, %163 : vector<1x8x8xf32>
    "tpu.trace_start"() <{level = 10 : i32, message = "bqk,bkd->bqd"}> : () -> ()
    %cst_59 = arith.constant dense<0.000000e+00> : vector<1x8x8xf32>
    %165 = tpu.matmul %164, %155, %cst_59 {dimension_numbers = #tpu.dot_dimension_numbers<[2], [1], [1], [2], [0, 0, 0, 1, 1, 2], [0], [0]>} : vector<1x8x8xf32>, vector<1x8x8xf32>, vector<1x8x8xf32> -> vector<1x8x8xf32>
    "tpu.trace_stop"() : () -> ()
    %166 = vector.shape_cast %165 : vector<1x8x8xf32> to vector<8x8xf32>
    %167 = vector.extract_strided_slice %139 {offsets = [0, 8], sizes = [8, 8], strides = [1, 1]} : vector<8x32xf32> to vector<8x8xf32>
    %168 = vector.shape_cast %167 : vector<8x8xf32> to vector<1x8x8xf32>
    %169 = vector.extract_strided_slice %144 {offsets = [0, 8], sizes = [8, 8], strides = [1, 1]} : vector<8x32xf32> to vector<8x8xf32>
    %170 = vector.shape_cast %169 : vector<8x8xf32> to vector<1x8x8xf32>
    %171 = vector.extract_strided_slice %149 {offsets = [0, 8], sizes = [8, 8], strides = [1, 1]} : vector<8x32xf32> to vector<8x8xf32>
    %172 = vector.shape_cast %171 : vector<8x8xf32> to vector<1x8x8xf32>
    "tpu.trace_start"() <{level = 10 : i32, message = "bqd,bkd->bqk"}> : () -> ()
    %cst_60 = arith.constant dense<0.000000e+00> : vector<1x8x8xf32>
    %173 = tpu.matmul %168, %170, %cst_60 {dimension_numbers = #tpu.dot_dimension_numbers<[2], [2], [1], [1], [0, 0, 0, 1, 1, 1], [0], [0]>} : vector<1x8x8xf32>, vector<1x8x8xf32>, vector<1x8x8xf32> -> vector<1x8x8xf32>
    "tpu.trace_stop"() : () -> ()
    %cst_61 = arith.constant 0.353553385 : f32
    %174 = vector.broadcast %cst_61 : f32 to vector<1x8x8xf32>
    %175 = arith.mulf %173, %174 : vector<1x8x8xf32>
    %176 = math.exp %175 : vector<1x8x8xf32>
    %cst_62 = arith.constant dense<0.000000e+00> : vector<1x8xf32>
    %177 = vector.multi_reduction <add>, %176, %cst_62 [2] : vector<1x8x8xf32> to vector<1x8xf32>
    %178 = vector.shape_cast %177 : vector<1x8xf32> to vector<1x8x1xf32>
    %179 = tpu.reciprocal %178 : vector<1x8x1xf32> -> vector<1x8x1xf32>
    %180 = vector.broadcast %179 : vector<1x8x1xf32> to vector<1x8x8xf32>
    %181 = arith.mulf %176, %180 : vector<1x8x8xf32>
    "tpu.trace_start"() <{level = 10 : i32, message = "bqk,bkd->bqd"}> : () -> ()
    %cst_63 = arith.constant dense<0.000000e+00> : vector<1x8x8xf32>
    %182 = tpu.matmul %181, %172, %cst_63 {dimension_numbers = #tpu.dot_dimension_numbers<[2], [1], [1], [2], [0, 0, 0, 1, 1, 2], [0], [0]>} : vector<1x8x8xf32>, vector<1x8x8xf32>, vector<1x8x8xf32> -> vector<1x8x8xf32>
    "tpu.trace_stop"() : () -> ()
    %183 = vector.shape_cast %182 : vector<1x8x8xf32> to vector<8x8xf32>
    %184 = vector.extract_strided_slice %139 {offsets = [0, 16], sizes = [8, 8], strides = [1, 1]} : vector<8x32xf32> to vector<8x8xf32>
    %185 = vector.shape_cast %184 : vector<8x8xf32> to vector<1x8x8xf32>
    %186 = vector.extract_strided_slice %144 {offsets = [0, 16], sizes = [8, 8], strides = [1, 1]} : vector<8x32xf32> to vector<8x8xf32>
    %187 = vector.shape_cast %186 : vector<8x8xf32> to vector<1x8x8xf32>
    %188 = vector.extract_strided_slice %149 {offsets = [0, 16], sizes = [8, 8], strides = [1, 1]} : vector<8x32xf32> to vector<8x8xf32>
    %189 = vector.shape_cast %188 : vector<8x8xf32> to vector<1x8x8xf32>
    "tpu.trace_start"() <{level = 10 : i32, message = "bqd,bkd->bqk"}> : () -> ()
    %cst_64 = arith.constant dense<0.000000e+00> : vector<1x8x8xf32>
    %190 = tpu.matmul %185, %187, %cst_64 {dimension_numbers = #tpu.dot_dimension_numbers<[2], [2], [1], [1], [0, 0, 0, 1, 1, 1], [0], [0]>} : vector<1x8x8xf32>, vector<1x8x8xf32>, vector<1x8x8xf32> -> vector<1x8x8xf32>
    "tpu.trace_stop"() : () -> ()
    %cst_65 = arith.constant 0.353553385 : f32
    %191 = vector.broadcast %cst_65 : f32 to vector<1x8x8xf32>
    %192 = arith.mulf %190, %191 : vector<1x8x8xf32>
    %193 = math.exp %192 : vector<1x8x8xf32>
    %cst_66 = arith.constant dense<0.000000e+00> : vector<1x8xf32>
    %194 = vector.multi_reduction <add>, %193, %cst_66 [2] : vector<1x8x8xf32> to vector<1x8xf32>
    %195 = vector.shape_cast %194 : vector<1x8xf32> to vector<1x8x1xf32>
    %196 = tpu.reciprocal %195 : vector<1x8x1xf32> -> vector<1x8x1xf32>
    %197 = vector.broadcast %196 : vector<1x8x1xf32> to vector<1x8x8xf32>
    %198 = arith.mulf %193, %197 : vector<1x8x8xf32>
    "tpu.trace_start"() <{level = 10 : i32, message = "bqk,bkd->bqd"}> : () -> ()
    %cst_67 = arith.constant dense<0.000000e+00> : vector<1x8x8xf32>
    %199 = tpu.matmul %198, %189, %cst_67 {dimension_numbers = #tpu.dot_dimension_numbers<[2], [1], [1], [2], [0, 0, 0, 1, 1, 2], [0], [0]>} : vector<1x8x8xf32>, vector<1x8x8xf32>, vector<1x8x8xf32> -> vector<1x8x8xf32>
    "tpu.trace_stop"() : () -> ()
    %200 = vector.shape_cast %199 : vector<1x8x8xf32> to vector<8x8xf32>
    %201 = vector.extract_strided_slice %139 {offsets = [0, 24], sizes = [8, 8], strides = [1, 1]} : vector<8x32xf32> to vector<8x8xf32>
    %202 = vector.shape_cast %201 : vector<8x8xf32> to vector<1x8x8xf32>
    %203 = vector.extract_strided_slice %144 {offsets = [0, 24], sizes = [8, 8], strides = [1, 1]} : vector<8x32xf32> to vector<8x8xf32>
    %204 = vector.shape_cast %203 : vector<8x8xf32> to vector<1x8x8xf32>
    %205 = vector.extract_strided_slice %149 {offsets = [0, 24], sizes = [8, 8], strides = [1, 1]} : vector<8x32xf32> to vector<8x8xf32>
    %206 = vector.shape_cast %205 : vector<8x8xf32> to vector<1x8x8xf32>
    "tpu.trace_start"() <{level = 10 : i32, message = "bqd,bkd->bqk"}> : () -> ()
    %cst_68 = arith.constant dense<0.000000e+00> : vector<1x8x8xf32>
    %207 = tpu.matmul %202, %204, %cst_68 {dimension_numbers = #tpu.dot_dimension_numbers<[2], [2], [1], [1], [0, 0, 0, 1, 1, 1], [0], [0]>} : vector<1x8x8xf32>, vector<1x8x8xf32>, vector<1x8x8xf32> -> vector<1x8x8xf32>
    "tpu.trace_stop"() : () -> ()
    %cst_69 = arith.constant 0.353553385 : f32
    %208 = vector.broadcast %cst_69 : f32 to vector<1x8x8xf32>
    %209 = arith.mulf %207, %208 : vector<1x8x8xf32>
    %210 = math.exp %209 : vector<1x8x8xf32>
    %cst_70 = arith.constant dense<0.000000e+00> : vector<1x8xf32>
    %211 = vector.multi_reduction <add>, %210, %cst_70 [2] : vector<1x8x8xf32> to vector<1x8xf32>
    %212 = vector.shape_cast %211 : vector<1x8xf32> to vector<1x8x1xf32>
    %213 = tpu.reciprocal %212 : vector<1x8x1xf32> -> vector<1x8x1xf32>
    %214 = vector.broadcast %213 : vector<1x8x1xf32> to vector<1x8x8xf32>
    %215 = arith.mulf %210, %214 : vector<1x8x8xf32>
    "tpu.trace_start"() <{level = 10 : i32, message = "bqk,bkd->bqd"}> : () -> ()
    %cst_71 = arith.constant dense<0.000000e+00> : vector<1x8x8xf32>
    %216 = tpu.matmul %215, %206, %cst_71 {dimension_numbers = #tpu.dot_dimension_numbers<[2], [1], [1], [2], [0, 0, 0, 1, 1, 2], [0], [0]>} : vector<1x8x8xf32>, vector<1x8x8xf32>, vector<1x8x8xf32> -> vector<1x8x8xf32>
    "tpu.trace_stop"() : () -> ()
    %217 = vector.shape_cast %216 : vector<1x8x8xf32> to vector<8x8xf32>
    %218 = tpu.concatenate %166, %183, %200, %217 in 1 : vector<8x8xf32>, vector<8x8xf32>, vector<8x8xf32>, vector<8x8xf32> -> vector<8x32xf32>
    %c0_72 = arith.constant 0 : index
    %c0_73 = arith.constant 0 : index
    %c0_74 = arith.constant 0 : index
    %219 = vector.load %arg10[%c0_72, %c0_73, %c0_74] : memref<1x32x32xf32, #tpu.memory_space<vmem>>, vector<1x32x32xf32>
    %220 = vector.shape_cast %219 : vector<1x32x32xf32> to vector<32x32xf32>
    %cst_75 = arith.constant dense<0.000000e+00> : vector<8x32xf32>
    %221 = tpu.matmul %218, %220, %cst_75 {dimension_numbers = #tpu.dot_dimension_numbers<[1], [0], [0], [1], [0, 0, 1, 1], [], []>} : vector<8x32xf32>, vector<32x32xf32>, vector<8x32xf32> -> vector<8x32xf32>
    %222 = vector.broadcast %13 : vector<1x32xf32> to vector<8x32xf32>
    %223 = arith.addf %221, %222 : vector<8x32xf32>
    %cst_76 = arith.constant dense<0.000000e+00> : vector<8xf32>
    %224 = vector.multi_reduction <add>, %223, %cst_76 [1] : vector<8x32xf32> to vector<8xf32>
    %225 = vector.shape_cast %224 : vector<8xf32> to vector<8x1xf32>
    %cst_77 = arith.constant 3.200000e+01 : f32
    %226 = vector.broadcast %cst_77 : f32 to vector<8x1xf32>
    %227 = arith.divf %225, %226 : vector<8x1xf32>
    %228 = vector.broadcast %227 : vector<8x1xf32> to vector<8x32xf32>
    %229 = arith.subf %223, %228 : vector<8x32xf32>
    %230 = arith.mulf %229, %229 : vector<8x32xf32>
    %cst_78 = arith.constant dense<0.000000e+00> : vector<8xf32>
    %231 = vector.multi_reduction <add>, %230, %cst_78 [1] : vector<8x32xf32> to vector<8xf32>
    %232 = vector.shape_cast %231 : vector<8xf32> to vector<8x1xf32>
    %cst_79 = arith.constant 3.200000e+01 : f32
    %233 = vector.broadcast %cst_79 : f32 to vector<8x1xf32>
    %234 = arith.divf %232, %233 : vector<8x1xf32>
    %235 = vector.broadcast %227 : vector<8x1xf32> to vector<8x32xf32>
    %236 = arith.subf %223, %235 : vector<8x32xf32>
    %cst_80 = arith.constant 9.99999974E-6 : f32
    %237 = vector.broadcast %cst_80 : f32 to vector<8x1xf32>
    %238 = arith.addf %234, %237 : vector<8x1xf32>
    %239 = math.rsqrt %238 : vector<8x1xf32>
    %240 = vector.broadcast %239 : vector<8x1xf32> to vector<8x32xf32>
    %241 = arith.mulf %236, %240 : vector<8x32xf32>
    %242 = vector.broadcast %17 : vector<1x32xf32> to vector<8x32xf32>
    %243 = arith.mulf %241, %242 : vector<8x32xf32>
    %244 = vector.broadcast %18 : vector<1x32xf32> to vector<8x32xf32>
    %245 = arith.addf %243, %244 : vector<8x32xf32>
    %246 = arith.addf %134, %245 : vector<8x32xf32>
    %c0_81 = arith.constant 0 : index
    %c0_82 = arith.constant 0 : index
    %c0_83 = arith.constant 0 : index
    %247 = vector.load %arg11[%c0_81, %c0_82, %c0_83] : memref<1x32x64xf32, #tpu.memory_space<vmem>>, vector<1x32x64xf32>
    %248 = vector.shape_cast %247 : vector<1x32x64xf32> to vector<32x64xf32>
    %cst_84 = arith.constant dense<0.000000e+00> : vector<8x64xf32>
    %249 = tpu.matmul %246, %248, %cst_84 {dimension_numbers = #tpu.dot_dimension_numbers<[1], [0], [0], [1], [0, 0, 1, 1], [], []>} : vector<8x32xf32>, vector<32x64xf32>, vector<8x64xf32> -> vector<8x64xf32>
    %250 = vector.broadcast %22 : vector<1x64xf32> to vector<8x64xf32>
    %251 = arith.addf %249, %250 : vector<8x64xf32>
    %cst_85 = arith.constant 0.000000e+00 : f32
    %252 = vector.broadcast %cst_85 : f32 to vector<8x64xf32>
    %253 = arith.maximumf %251, %252 : vector<8x64xf32>
    %c0_86 = arith.constant 0 : index
    %c0_87 = arith.constant 0 : index
    %c0_88 = arith.constant 0 : index
    %254 = vector.load %arg12[%c0_86, %c0_87, %c0_88] : memref<1x64x32xf32, #tpu.memory_space<vmem>>, vector<1x64x32xf32>
    %255 = vector.shape_cast %254 : vector<1x64x32xf32> to vector<64x32xf32>
    %cst_89 = arith.constant dense<0.000000e+00> : vector<8x32xf32>
    %256 = tpu.matmul %253, %255, %cst_89 {dimension_numbers = #tpu.dot_dimension_numbers<[1], [0], [0], [1], [0, 0, 1, 1], [], []>} : vector<8x64xf32>, vector<64x32xf32>, vector<8x32xf32> -> vector<8x32xf32>
    %257 = vector.broadcast %14 : vector<1x32xf32> to vector<8x32xf32>
    %258 = arith.addf %256, %257 : vector<8x32xf32>
    %cst_90 = arith.constant dense<0.000000e+00> : vector<8xf32>
    %259 = vector.multi_reduction <add>, %258, %cst_90 [1] : vector<8x32xf32> to vector<8xf32>
    %260 = vector.shape_cast %259 : vector<8xf32> to vector<8x1xf32>
    %cst_91 = arith.constant 3.200000e+01 : f32
    %261 = vector.broadcast %cst_91 : f32 to vector<8x1xf32>
    %262 = arith.divf %260, %261 : vector<8x1xf32>
    %263 = vector.broadcast %262 : vector<8x1xf32> to vector<8x32xf32>
    %264 = arith.subf %258, %263 : vector<8x32xf32>
    %265 = arith.mulf %264, %264 : vector<8x32xf32>
    %cst_92 = arith.constant dense<0.000000e+00> : vector<8xf32>
    %266 = vector.multi_reduction <add>, %265, %cst_92 [1] : vector<8x32xf32> to vector<8xf32>
    %267 = vector.shape_cast %266 : vector<8xf32> to vector<8x1xf32>
    %cst_93 = arith.constant 3.200000e+01 : f32
    %268 = vector.broadcast %cst_93 : f32 to vector<8x1xf32>
    %269 = arith.divf %267, %268 : vector<8x1xf32>
    %270 = vector.broadcast %262 : vector<8x1xf32> to vector<8x32xf32>
    %271 = arith.subf %258, %270 : vector<8x32xf32>
    %cst_94 = arith.constant 9.99999974E-6 : f32
    %272 = vector.broadcast %cst_94 : f32 to vector<8x1xf32>
    %273 = arith.addf %269, %272 : vector<8x1xf32>
    %274 = math.rsqrt %273 : vector<8x1xf32>
    %275 = vector.broadcast %274 : vector<8x1xf32> to vector<8x32xf32>
    %276 = arith.mulf %271, %275 : vector<8x32xf32>
    %277 = vector.broadcast %19 : vector<1x32xf32> to vector<8x32xf32>
    %278 = arith.mulf %276, %277 : vector<8x32xf32>
    %279 = vector.broadcast %20 : vector<1x32xf32> to vector<8x32xf32>
    %280 = arith.addf %278, %279 : vector<8x32xf32>
    %281 = arith.addf %246, %280 : vector<8x32xf32>
    %c0_95 = arith.constant 0 : index
    %c0_96 = arith.constant 0 : index
    %282 = vector.load %arg15[%c0_95, %c0_96] : memref<8x32xf32, #tpu.memory_space<vmem>>, vector<8x32xf32>
    tpu.vector_store %arg15[%c0_95, %c0_96], %281 {strides = array<i32>} : memref<8x32xf32, #tpu.memory_space<vmem>>, vector<8x32xf32>,
    return
  }
  func.func @transform_0(%arg0: i32, %arg1: i32) -> (i32, i32) {
    %c0_i32 = arith.constant 0 : i32
    %c0_i32_0 = arith.constant 0 : i32
    return %arg0, %c0_i32 : i32, i32
  }
  func.func @transform_1(%arg0: i32, %arg1: i32) -> (i32, i32, i32) {
    %c0_i32 = arith.constant 0 : i32
    %c0_i32_0 = arith.constant 0 : i32
    %c0_i32_1 = arith.constant 0 : i32
    return %arg1, %c0_i32, %c0_i32_0 : i32, i32, i32
  }
  func.func @transform_2(%arg0: i32, %arg1: i32) -> (i32, i32, i32) {
    %c0_i32 = arith.constant 0 : i32
    %c0_i32_0 = arith.constant 0 : i32
    %c0_i32_1 = arith.constant 0 : i32
    return %arg1, %c0_i32, %c0_i32_0 : i32, i32, i32
  }
  func.func @transform_3(%arg0: i32, %arg1: i32) -> (i32, i32, i32) {
    %c0_i32 = arith.constant 0 : i32
    %c0_i32_0 = arith.constant 0 : i32
    %c0_i32_1 = arith.constant 0 : i32
    return %arg1, %c0_i32, %c0_i32_0 : i32, i32, i32
  }
  func.func @transform_4(%arg0: i32, %arg1: i32) -> (i32, i32, i32) {
    %c0_i32 = arith.constant 0 : i32
    %c0_i32_0 = arith.constant 0 : i32
    %c0_i32_1 = arith.constant 0 : i32
    return %arg1, %c0_i32, %c0_i32_0 : i32, i32, i32
  }
  func.func @transform_5(%arg0: i32, %arg1: i32) -> (i32, i32, i32) {
    %c0_i32 = arith.constant 0 : i32
    %c0_i32_0 = arith.constant 0 : i32
    %c0_i32_1 = arith.constant 0 : i32
    return %arg1, %c0_i32, %c0_i32_0 : i32, i32, i32
  }
  func.func @transform_6(%arg0: i32, %arg1: i32) -> (i32, i32, i32) {
    %c0_i32 = arith.constant 0 : i32
    %c0_i32_0 = arith.constant 0 : i32
    %c0_i32_1 = arith.constant 0 : i32
    return %arg1, %c0_i32, %c0_i32_0 : i32, i32, i32
  }
  func.func @transform_7(%arg0: i32, %arg1: i32) -> (i32, i32, i32) {
    %c0_i32 = arith.constant 0 : i32
    %c0_i32_0 = arith.constant 0 : i32
    %c0_i32_1 = arith.constant 0 : i32
    return %arg1, %c0_i32, %c0_i32_0 : i32, i32, i32
  }
  func.func @transform_8(%arg0: i32, %arg1: i32) -> (i32, i32, i32) {
    %c0_i32 = arith.constant 0 : i32
    %c0_i32_0 = arith.constant 0 : i32
    %c0_i32_1 = arith.constant 0 : i32
    return %arg1, %c0_i32, %c0_i32_0 : i32, i32, i32
  }
  func.func @transform_9(%arg0: i32, %arg1: i32) -> (i32, i32, i32) {
    %c0_i32 = arith.constant 0 : i32
    %c0_i32_0 = arith.constant 0 : i32
    %c0_i32_1 = arith.constant 0 : i32
    return %arg1, %c0_i32, %c0_i32_0 : i32, i32, i32
  }
  func.func @transform_10(%arg0: i32, %arg1: i32) -> (i32, i32, i32) {
    %c0_i32 = arith.constant 0 : i32
    %c0_i32_0 = arith.constant 0 : i32
    %c0_i32_1 = arith.constant 0 : i32
    return %arg1, %c0_i32, %c0_i32_0 : i32, i32, i32
  }
  func.func @transform_11(%arg0: i32, %arg1: i32) -> (i32, i32, i32) {
    %c0_i32 = arith.constant 0 : i32
    %c0_i32_0 = arith.constant 0 : i32
    %c0_i32_1 = arith.constant 0 : i32
    return %arg1, %c0_i32, %c0_i32_0 : i32, i32, i32
  }
  func.func @transform_12(%arg0: i32, %arg1: i32) -> (i32, i32, i32) {
    %c0_i32 = arith.constant 0 : i32
    %c0_i32_0 = arith.constant 0 : i32
    %c0_i32_1 = arith.constant 0 : i32
    return %arg1, %c0_i32, %c0_i32_0 : i32, i32, i32
  }
  func.func @transform_13(%arg0: i32, %arg1: i32) -> (i32, i32) {
    %c0_i32 = arith.constant 0 : i32
    %c0_i32_0 = arith.constant 0 : i32
    return %arg0, %c0_i32 : i32, i32
  }
}

</mosaic_0001>

<llo_original>
// kernel: tpu_custom_call.1
$region0: #{tpu_custom_call.1}
  #allocation0 [shape = 'u32[]', space=smem, size = 0x4, offset = 0x4, fixed_abs, tag = 'smem constant byte address 0x4 - core index']
  #allocation1 [shape = 'u32[72,128]{1,0:T(1,128)}', space=vmem, size = 0x9000, scoped, tag = 'internal scratch']
  %s0 = inlined_call_operand.hbm [shape: f32[16,32], index: 0, kind: input, shape index: {}]
  %s1 = inlined_call_operand.vmem [shape: f32[2,32,32], index: 1, kind: input, shape index: {}]
  %s2 = inlined_call_operand.vmem [shape: f32[2,32,32], index: 2, kind: input, shape index: {}]
  %s3 = inlined_call_operand.vmem [shape: f32[2,32,32], index: 3, kind: input, shape index: {}]
  %s4 = inlined_call_operand.hbm [shape: f32[2,32,32], index: 4, kind: input, shape index: {}]
  %s5 = inlined_call_operand.hbm [shape: f32[2,32,32], index: 5, kind: input, shape index: {}]
  %s6 = inlined_call_operand.hbm [shape: f32[2,32,32], index: 6, kind: input, shape index: {}]
  %s7 = inlined_call_operand.hbm [shape: f32[2,32,32], index: 7, kind: input, shape index: {}]
  %s8 = inlined_call_operand.hbm [shape: f32[2,32,32], index: 8, kind: input, shape index: {}]
  %s9 = inlined_call_operand.hbm [shape: f32[2,32,64], index: 9, kind: input, shape index: {}]
  %s10 = inlined_call_operand.vmem [shape: f32[2,64,32], index: 10, kind: input, shape index: {}]
  %s11 = inlined_call_operand.vmem [shape: f32[2,1,64], index: 11, kind: input, shape index: {}]
  %s12 = inlined_call_operand.hbm [shape: f32[2,16,32], index: 12, kind: input, shape index: {}]
  %s13 = inlined_call_operand.hbm [shape: f32[16,32], index: 13, kind: output, shape index: {}]
  %s14 = sld [smem:[#allocation0]]
  $region121: #{tpu_custom_call.1} parent=0
    _
  %s16 = ssub.s32 1, %s14
  %s17 = scalar_select 0, %s16, %s14
  $region1: #{tpu_custom_call.1} parent=0
    #allocation2 [shape = 'u8[8192]{0}', space=vmem, size = 0x2000, scoped, tag = 'input window, operand 0']
    #allocation3 [shape = 's32[2]{0}', space=sflag, size = 0x8, scoped, tag = 'scoped memory for tpu_custom_call.1']
    #allocation4 [shape = 's32[2]{0}', space=sflag, size = 0x8, scoped, tag = 'scoped memory for tpu_custom_call.1']
    #allocation5 [shape = 'u8[32768]{0}', space=vmem, size = 0x8000, scoped, tag = 'input window, operand 4']
    #allocation6 [shape = 's32[2]{0}', space=sflag, size = 0x8, scoped, tag = 'scoped memory for tpu_custom_call.1']
    #allocation7 [shape = 'u8[32768]{0}', space=vmem, size = 0x8000, scoped, tag = 'input window, operand 5']
    #allocation8 [shape = 'u8[32768]{0}', space=vmem, size = 0x8000, scoped, tag = 'input window, operand 6']
    #allocation9 [shape = 's32[2]{0}', space=sflag, size = 0x8, scoped, tag = 'scoped memory for tpu_custom_call.1']
    #allocation10 [shape = 'u8[32768]{0}', space=vmem, size = 0x8000, scoped, tag = 'input window, operand 7']
    #allocation11 [shape = 'u8[32768]{0}', space=vmem, size = 0x8000, scoped, tag = 'input window, operand 8']
    #allocation12 [shape = 's32[2]{0}', space=sflag, size = 0x8, scoped, tag = 'scoped memory for tpu_custom_call.1']
    #allocation13 [shape = 'u8[32768]{0}', space=vmem, size = 0x8000, scoped, tag = 'input window, operand 9']
    #allocation14 [shape = 'u8[16384]{0}', space=vmem, size = 0x4000, scoped, tag = 'input window, operand 12']
    #allocation15 [shape = 's32[2]{0}', space=sflag, size = 0x8, scoped, tag = 'scoped memory for tpu_custom_call.1']
    #allocation16 [shape = 'u8[8192]{0}', space=vmem, size = 0x2000, scoped, tag = 'output window, operand 0']
    %18 = vsyncpa [#allocation3], 0
    %s19 = scalar_lea.sflag [#allocation3], 1
    %20 = vsyncpa %s19, 0
    %21 = vsyncpa [#allocation6], 0
    %s22 = scalar_lea.sflag [#allocation6], 1
    %23 = vsyncpa %s22, 0
    %24 = vsyncpa [#allocation9], 0
    %s25 = scalar_lea.sflag [#allocation9], 1
    %26 = vsyncpa %s25, 0
    %27 = vsyncpa [#allocation12], 0
    %s28 = scalar_lea.sflag [#allocation12], 1
    %29 = vsyncpa %s28, 0
    %30 = vsyncpa [#allocation15], 0
    %s31 = scalar_lea.sflag [#allocation15], 1
    %32 = vsyncpa %s31, 0
    %33 = vsyncpa [#allocation4], 0
    %s34 = scalar_lea.sflag [#allocation4], 1
    %35 = vsyncpa %s34, 0
    loop: start=0, step=1, limit=6
    $region2: #{tpu_custom_call.1} parent=1 // loop_pre_header
      _
    $region3: #{tpu_custom_call.1} parent=1 // loop_header
      %s37 = sphi 0, %s41
      %p38 = scmp.ge.s32.totalorder %s37, 6
      %s44 = sphi 0, %s56
      %s45 = sphi 0, %s52
      %s46 = sphi 0, %s44
      %s47 = sphi 0, %s45
      %s48 = sphi 0, %s46
      %s49 = sphi 0, %s47
      %s59 = sphi 0, %s61
      %s62 = sphi 0, %s59
      %s63 = sphi 0, %s62
      %s79 = sphi 0, %s63
      %s85 = sphi 0, %s87
      %s88 = sphi 0, %s85
      %s89 = sphi 0, %s88
      %s105 = sphi 0, %s89
      %s111 = sphi 0, %s113
      %s114 = sphi 0, %s111
      %s115 = sphi 0, %s114
      %s131 = sphi 0, %s115
      %s137 = sphi 0, %s139
      %s140 = sphi 0, %s137
      %s141 = sphi 0, %s140
      %s157 = sphi 0, %s141
      %s163 = sphi 0, %s165
      %s166 = sphi 0, %s163
      %s167 = sphi 0, %s166
      %s183 = sphi 0, %s167
      %s189 = sphi 0, %s191
      %s192 = sphi 0, %s189
      %s193 = sphi 0, %s192
      %s209 = sphi 0, %s193
      %s215 = sphi 0, %s217
      %s218 = sphi 0, %s215
      %s219 = sphi 0, %s218
      %s235 = sphi 0, %s219
      %s241 = sphi 0, %s243
      %s244 = sphi 0, %s241
      %s245 = sphi 0, %s244
      %s261 = sphi 0, %s245
      %s267 = sphi 0, %s269
      %s270 = sphi 0, %s267
      %s271 = sphi 0, %s270
      %s287 = sphi 0, %s271
      %s293 = sphi 0, %s295
      %s296 = sphi 0, %s293
      %s297 = sphi 0, %s296
      %s313 = sphi 0, %s297
      %s319 = sphi 0, %s321
      %s322 = sphi 0, %s319
      %s323 = sphi 0, %s322
      %s339 = sphi 0, %s323
      %s345 = sphi 0, %s347
      %s348 = sphi 0, %s345
      %s349 = sphi 0, %s348
      %s365 = sphi 0, %s349
      %s371 = sphi 0, %s373
      %s374 = sphi 0, %s371
      %s375 = sphi 0, %s374
      %s391 = sphi 0, %s375
      %s397 = sphi 0, %s399
      %s400 = sphi 0, %s397
      %s401 = sphi 0, %s400
      %s417 = sphi 0, %s401
    $region4: #{tpu_custom_call.1} parent=1 // loop_header_branch
      %40 = sbr.rel (%p38) target = $region8
    $region5: #{tpu_custom_call.1} parent=1 // loop_body
      %s42 = ssub.s32 %s37, 1
      %s43 = ssub.s32 %s37, 2
      %s50 = sadd.s32 1, %s45
      %p51 = scmp.ge.s32.totalorder %s50, 2
      %s52 = scalar_select %p51, 0, %s50
      %s53 = sadd.s32 1, %s44
      %s54 = scalar_select %p51, %s53, %s44
      %p55 = scmp.ge.s32.totalorder %s54, 2
      %s56 = scalar_select %p55, 0, %s54
      %s57 = ssub.s32 %s44, %s56
      %p58 = scmp.eq.s32.totalorder %s57, 0
      %s60 = sadd.s32 %s59, 1
      %s61 = scalar_select %p58, %s59, %s60
      %p64 = pneg %p58
      %p65 = scmp.eq.s32.totalorder %s37, 3
      %p66 = por %p64, %p65
      %p67 = scmp.ne.s32.totalorder %s59, %s62
      %p68 = scmp.eq.s32.totalorder %s37, 0
      %p69 = por %p67, %p68
      %p70 = scmp.ne.s32.totalorder %s59, %s62
      %p71 = scmp.eq.s32.totalorder %s42, 3
      %p72 = por %p70, %p71
      %p73 = scmp.ne.s32.totalorder %s62, %s63
      %p74 = scmp.eq.s32.totalorder %s42, 0
      %p75 = por %p73, %p74
      %p76 = scmp.ne.s32.totalorder %s62, %s63
      %p77 = scmp.eq.s32.totalorder %s43, 3
      %p78 = por %p76, %p77
      %p80 = scmp.ne.s32.totalorder %s63, %s79
      %p81 = scmp.eq.s32.totalorder %s43, 0
      %p82 = por %p80, %p81
      %s83 = ssub.s32 %s45, %s52
      %p84 = scmp.eq.s32.totalorder %s83, 0
      %s86 = sadd.s32 %s85, 1
      %s87 = scalar_select %p84, %s85, %s86
      %p90 = pneg %p84
      %p91 = scmp.eq.s32.totalorder %s37, 3
      %p92 = por %p90, %p91
      %p93 = scmp.ne.s32.totalorder %s85, %s88
      %p94 = scmp.eq.s32.totalorder %s37, 0
      %p95 = por %p93, %p94
      %p96 = scmp.ne.s32.totalorder %s85, %s88
      %p97 = scmp.eq.s32.totalorder %s42, 3
      %p98 = por %p96, %p97
      %p99 = scmp.ne.s32.totalorder %s88, %s89
      %p100 = scmp.eq.s32.totalorder %s42, 0
      %p101 = por %p99, %p100
      %p102 = scmp.ne.s32.totalorder %s88, %s89
      %p103 = scmp.eq.s32.totalorder %s43, 3
      %p104 = por %p102, %p103
      %p106 = scmp.ne.s32.totalorder %s89, %s105
      %p107 = scmp.eq.s32.totalorder %s43, 0
      %p108 = por %p106, %p107
      %s109 = ssub.s32 %s45, %s52
      %p110 = scmp.eq.s32.totalorder %s109, 0
      %s112 = sadd.s32 %s111, 1
      %s113 = scalar_select %p110, %s111, %s112
      %p116 = pneg %p110
      %p117 = scmp.eq.s32.totalorder %s37, 3
      %p118 = por %p116, %p117
      %p119 = scmp.ne.s32.totalorder %s111, %s114
      %p120 = scmp.eq.s32.totalorder %s37, 0
      %p121 = por %p119, %p120
      %p122 = scmp.ne.s32.totalorder %s111, %s114
      %p123 = scmp.eq.s32.totalorder %s42, 3
      %p124 = por %p122, %p123
      %p125 = scmp.ne.s32.totalorder %s114, %s115
      %p126 = scmp.eq.s32.totalorder %s42, 0
      %p127 = por %p125, %p126
      %p128 = scmp.ne.s32.totalorder %s114, %s115
      %p129 = scmp.eq.s32.totalorder %s43, 3
      %p130 = por %p128, %p129
      %p132 = scmp.ne.s32.totalorder %s115, %s131
      %p133 = scmp.eq.s32.totalorder %s43, 0
      %p134 = por %p132, %p133
      %s135 = ssub.s32 %s45, %s52
      %p136 = scmp.eq.s32.totalorder %s135, 0
      %s138 = sadd.s32 %s137, 1
      %s139 = scalar_select %p136, %s137, %s138
      %p142 = pneg %p136
      %p143 = scmp.eq.s32.totalorder %s37, 3
      %p144 = por %p142, %p143
      %p145 = scmp.ne.s32.totalorder %s137, %s140
      %p146 = scmp.eq.s32.totalorder %s37, 0
      %p147 = por %p145, %p146
      %p148 = scmp.ne.s32.totalorder %s137, %s140
      %p149 = scmp.eq.s32.totalorder %s42, 3
      %p150 = por %p148, %p149
      %p151 = scmp.ne.s32.totalorder %s140, %s141
      %p152 = scmp.eq.s32.totalorder %s42, 0
      %p153 = por %p151, %p152
      %p154 = scmp.ne.s32.totalorder %s140, %s141
      %p155 = scmp.eq.s32.totalorder %s43, 3
      %p156 = por %p154, %p155
      %p158 = scmp.ne.s32.totalorder %s141, %s157
      %p159 = scmp.eq.s32.totalorder %s43, 0
      %p160 = por %p158, %p159
      %s161 = ssub.s32 %s45, %s52
      %p162 = scmp.eq.s32.totalorder %s161, 0
      %s164 = sadd.s32 %s163, 1
      %s165 = scalar_select %p162, %s163, %s164
      %p168 = pneg %p162
      %p169 = scmp.eq.s32.totalorder %s37, 3
      %p170 = por %p168, %p169
      %p171 = scmp.ne.s32.totalorder %s163, %s166
      %p172 = scmp.eq.s32.totalorder %s37, 0
      %p173 = por %p171, %p172
      %p174 = scmp.ne.s32.totalorder %s163, %s166
      %p175 = scmp.eq.s32.totalorder %s42, 3
      %p176 = por %p174, %p175
      %p177 = scmp.ne.s32.totalorder %s166, %s167
      %p178 = scmp.eq.s32.totalorder %s42, 0
      %p179 = por %p177, %p178
      %p180 = scmp.ne.s32.totalorder %s166, %s167
      %p181 = scmp.eq.s32.totalorder %s43, 3
      %p182 = por %p180, %p181
      %p184 = scmp.ne.s32.totalorder %s167, %s183
      %p185 = scmp.eq.s32.totalorder %s43, 0
      %p186 = por %p184, %p185
      %s187 = ssub.s32 %s45, %s52
      %p188 = scmp.eq.s32.totalorder %s187, 0
      %s190 = sadd.s32 %s189, 1
      %s191 = scalar_select %p188, %s189, %s190
      %p194 = pneg %p188
      %p195 = scmp.eq.s32.totalorder %s37, 3
      %p196 = por %p194, %p195
      %p197 = scmp.ne.s32.totalorder %s189, %s192
      %p198 = scmp.eq.s32.totalorder %s37, 0
      %p199 = por %p197, %p198
      %p200 = scmp.ne.s32.totalorder %s189, %s192
      %p201 = scmp.eq.s32.totalorder %s42, 3
      %p202 = por %p200, %p201
      %p203 = scmp.ne.s32.totalorder %s192, %s193
      %p204 = scmp.eq.s32.totalorder %s42, 0
      %p205 = por %p203, %p204
      %p206 = scmp.ne.s32.totalorder %s192, %s193
      %p207 = scmp.eq.s32.totalorder %s43, 3
      %p208 = por %p206, %p207
      %p210 = scmp.ne.s32.totalorder %s193, %s209
      %p211 = scmp.eq.s32.totalorder %s43, 0
      %p212 = por %p210, %p211
      %s213 = ssub.s32 %s45, %s52
      %p214 = scmp.eq.s32.totalorder %s213, 0
      %s216 = sadd.s32 %s215, 1
      %s217 = scalar_select %p214, %s215, %s216
      %p220 = pneg %p214
      %p221 = scmp.eq.s32.totalorder %s37, 3
      %p222 = por %p220, %p221
      %p223 = scmp.ne.s32.totalorder %s215, %s218
      %p224 = scmp.eq.s32.totalorder %s37, 0
      %p225 = por %p223, %p224
      %p226 = scmp.ne.s32.totalorder %s215, %s218
      %p227 = scmp.eq.s32.totalorder %s42, 3
      %p228 = por %p226, %p227
      %p229 = scmp.ne.s32.totalorder %s218, %s219
      %p230 = scmp.eq.s32.totalorder %s42, 0
      %p231 = por %p229, %p230
      %p232 = scmp.ne.s32.totalorder %s218, %s219
      %p233 = scmp.eq.s32.totalorder %s43, 3
      %p234 = por %p232, %p233
      %p236 = scmp.ne.s32.totalorder %s219, %s235
      %p237 = scmp.eq.s32.totalorder %s43, 0
      %p238 = por %p236, %p237
      %s239 = ssub.s32 %s45, %s52
      %p240 = scmp.eq.s32.totalorder %s239, 0
      %s242 = sadd.s32 %s241, 1
      %s243 = scalar_select %p240, %s241, %s242
      %p246 = pneg %p240
      %p247 = scmp.eq.s32.totalorder %s37, 3
      %p248 = por %p246, %p247
      %p249 = scmp.ne.s32.totalorder %s241, %s244
      %p250 = scmp.eq.s32.totalorder %s37, 0
      %p251 = por %p249, %p250
      %p252 = scmp.ne.s32.totalorder %s241, %s244
      %p253 = scmp.eq.s32.totalorder %s42, 3
      %p254 = por %p252, %p253
      %p255 = scmp.ne.s32.totalorder %s244, %s245
      %p256 = scmp.eq.s32.totalorder %s42, 0
      %p257 = por %p255, %p256
      %p258 = scmp.ne.s32.totalorder %s244, %s245
      %p259 = scmp.eq.s32.totalorder %s43, 3
      %p260 = por %p258, %p259
      %p262 = scmp.ne.s32.totalorder %s245, %s261
      %p263 = scmp.eq.s32.totalorder %s43, 0
      %p264 = por %p262, %p263
      %s265 = ssub.s32 %s45, %s52
      %p266 = scmp.eq.s32.totalorder %s265, 0
      %s268 = sadd.s32 %s267, 1
      %s269 = scalar_select %p266, %s267, %s268
      %p272 = pneg %p266
      %p273 = scmp.eq.s32.totalorder %s37, 3
      %p274 = por %p272, %p273
      %p275 = scmp.ne.s32.totalorder %s267, %s270
      %p276 = scmp.eq.s32.totalorder %s37, 0
      %p277 = por %p275, %p276
      %p278 = scmp.ne.s32.totalorder %s267, %s270
      %p279 = scmp.eq.s32.totalorder %s42, 3
      %p280 = por %p278, %p279
      %p281 = scmp.ne.s32.totalorder %s270, %s271
      %p282 = scmp.eq.s32.totalorder %s42, 0
      %p283 = por %p281, %p282
      %p284 = scmp.ne.s32.totalorder %s270, %s271
      %p285 = scmp.eq.s32.totalorder %s43, 3
      %p286 = por %p284, %p285
      %p288 = scmp.ne.s32.totalorder %s271, %s287
      %p289 = scmp.eq.s32.totalorder %s43, 0
      %p290 = por %p288, %p289
      %s291 = ssub.s32 %s45, %s52
      %p292 = scmp.eq.s32.totalorder %s291, 0
      %s294 = sadd.s32 %s293, 1
      %s295 = scalar_select %p292, %s293, %s294
      %p298 = pneg %p292
      %p299 = scmp.eq.s32.totalorder %s37, 3
      %p300 = por %p298, %p299
      %p301 = scmp.ne.s32.totalorder %s293, %s296
      %p302 = scmp.eq.s32.totalorder %s37, 0
      %p303 = por %p301, %p302
      %p304 = scmp.ne.s32.totalorder %s293, %s296
      %p305 = scmp.eq.s32.totalorder %s42, 3
      %p306 = por %p304, %p305
      %p307 = scmp.ne.s32.totalorder %s296, %s297
      %p308 = scmp.eq.s32.totalorder %s42, 0
      %p309 = por %p307, %p308
      %p310 = scmp.ne.s32.totalorder %s296, %s297
      %p311 = scmp.eq.s32.totalorder %s43, 3
      %p312 = por %p310, %p311
      %p314 = scmp.ne.s32.totalorder %s297, %s313
      %p315 = scmp.eq.s32.totalorder %s43, 0
      %p316 = por %p314, %p315
      %s317 = ssub.s32 %s45, %s52
      %p318 = scmp.eq.s32.totalorder %s317, 0
      %s320 = sadd.s32 %s319, 1
      %s321 = scalar_select %p318, %s319, %s320
      %p324 = pneg %p318
      %p325 = scmp.eq.s32.totalorder %s37, 3
      %p326 = por %p324, %p325
      %p327 = scmp.ne.s32.totalorder %s319, %s322
      %p328 = scmp.eq.s32.totalorder %s37, 0
      %p329 = por %p327, %p328
      %p330 = scmp.ne.s32.totalorder %s319, %s322
      %p331 = scmp.eq.s32.totalorder %s42, 3
      %p332 = por %p330, %p331
      %p333 = scmp.ne.s32.totalorder %s322, %s323
      %p334 = scmp.eq.s32.totalorder %s42, 0
      %p335 = por %p333, %p334
      %p336 = scmp.ne.s32.totalorder %s322, %s323
      %p337 = scmp.eq.s32.totalorder %s43, 3
      %p338 = por %p336, %p337
      %p340 = scmp.ne.s32.totalorder %s323, %s339
      %p341 = scmp.eq.s32.totalorder %s43, 0
      %p342 = por %p340, %p341
      %s343 = ssub.s32 %s45, %s52
      %p344 = scmp.eq.s32.totalorder %s343, 0
      %s346 = sadd.s32 %s345, 1
      %s347 = scalar_select %p344, %s345, %s346
      %p350 = pneg %p344
      %p351 = scmp.eq.s32.totalorder %s37, 3
      %p352 = por %p350, %p351
      %p353 = scmp.ne.s32.totalorder %s345, %s348
      %p354 = scmp.eq.s32.totalorder %s37, 0
      %p355 = por %p353, %p354
      %p356 = scmp.ne.s32.totalorder %s345, %s348
      %p357 = scmp.eq.s32.totalorder %s42, 3
      %p358 = por %p356, %p357
      %p359 = scmp.ne.s32.totalorder %s348, %s349
      %p360 = scmp.eq.s32.totalorder %s42, 0
      %p361 = por %p359, %p360
      %p362 = scmp.ne.s32.totalorder %s348, %s349
      %p363 = scmp.eq.s32.totalorder %s43, 3
      %p364 = por %p362, %p363
      %p366 = scmp.ne.s32.totalorder %s349, %s365
      %p367 = scmp.eq.s32.totalorder %s43, 0
      %p368 = por %p366, %p367
      %s369 = ssub.s32 %s45, %s52
      %p370 = scmp.eq.s32.totalorder %s369, 0
      %s372 = sadd.s32 %s371, 1
      %s373 = scalar_select %p370, %s371, %s372
      %p376 = pneg %p370
      %p377 = scmp.eq.s32.totalorder %s37, 3
      %p378 = por %p376, %p377
      %p379 = scmp.ne.s32.totalorder %s371, %s374
      %p380 = scmp.eq.s32.totalorder %s37, 0
      %p381 = por %p379, %p380
      %p382 = scmp.ne.s32.totalorder %s371, %s374
      %p383 = scmp.eq.s32.totalorder %s42, 3
      %p384 = por %p382, %p383
      %p385 = scmp.ne.s32.totalorder %s374, %s375
      %p386 = scmp.eq.s32.totalorder %s42, 0
      %p387 = por %p385, %p386
      %p388 = scmp.ne.s32.totalorder %s374, %s375
      %p389 = scmp.eq.s32.totalorder %s43, 3
      %p390 = por %p388, %p389
      %p392 = scmp.ne.s32.totalorder %s375, %s391
      %p393 = scmp.eq.s32.totalorder %s43, 0
      %p394 = por %p392, %p393
      %s395 = ssub.s32 %s44, %s56
      %p396 = scmp.eq.s32.totalorder %s395, 0
      %s398 = sadd.s32 %s397, 1
      %s399 = scalar_select %p396, %s397, %s398
      %p402 = pneg %p396
      %p403 = scmp.eq.s32.totalorder %s37, 3
      %p404 = por %p402, %p403
      %p405 = scmp.ne.s32.totalorder %s397, %s400
      %p406 = scmp.eq.s32.totalorder %s37, 0
      %p407 = por %p405, %p406
      %p408 = scmp.ne.s32.totalorder %s397, %s400
      %p409 = scmp.eq.s32.totalorder %s42, 3
      %p410 = por %p408, %p409
      %p411 = scmp.ne.s32.totalorder %s400, %s401
      %p412 = scmp.eq.s32.totalorder %s42, 0
      %p413 = por %p411, %p412
      %p414 = scmp.ne.s32.totalorder %s400, %s401
      %p415 = scmp.eq.s32.totalorder %s43, 3
      %p416 = por %p414, %p415
      %p418 = scmp.ne.s32.totalorder %s401, %s417
      %p419 = scmp.eq.s32.totalorder %s43, 0
      %p420 = por %p418, %p419
      %p421 = scmp.le.s32.totalorder 1, %s37
      %p422 = scmp.lt.s32.totalorder %s37, 5
      %p423 = pnand %p421, %p422
      %p424 = pneg %p423
      // Predicated region
      $region9: #{tpu_custom_call.1} parent=5 // pred_check
        _
      $region10: #{tpu_custom_call.1} parent=5 // pred_check_branch
        %426 = sbr.rel (%p423) target = $region12
      $region11: #{tpu_custom_call.1} parent=5 // pred_region
        %s427 = ssub.s32 %s37, 1
      $region12: #{tpu_custom_call.1} parent=5 // pred_fallthru
        _
      %p428 = scmp.lt.s32.totalorder %s37, 4
      // Predicated region
      $region13: #{tpu_custom_call.1} parent=5 // pred_check
        %p429 = pneg %p428
      $region14: #{tpu_custom_call.1} parent=5 // pred_check_branch
        %431 = sbr.rel (%p429) target = $region16
      $region15: #{tpu_custom_call.1} parent=5 // pred_region
        // Predicated region
        $region17: #{tpu_custom_call.1} parent=15 // pred_check
          %p432 = pneg %p69
        $region18: #{tpu_custom_call.1} parent=15 // pred_check_branch
          %434 = sbr.rel (%p432) target = $region20
        $region19: #{tpu_custom_call.1} parent=15 // pred_region
          %s435 = sand.u32 %s59, 1
          %s436 = scalar_lea.sflag [#allocation3], %s435
          %s437 = sand.u32 %s59, 1
          %s438 = smul.addr %s437, 8
          %s439 = scalar_lea.vmem [#allocation2], %s438
          %441 = vsyncadd %s436, 0
          %s442 = smul.addr %s44, 8
          %s443 = scalar_lea.hbm %s0, %s442
          %s445 = sshll.u32 %s443, 4
          %s446 = int_to_ptr.hbm [resolvable:$true] %s445
          %s447 = sshll.u32 %s439, 4
          %s448 = int_to_ptr.vmem [resolvable:$true] %s447
          %450 = dma.hbm_to_vmem [thread:$0]  %s446, 128, %s448, %s436
        $region20: #{tpu_custom_call.1} parent=15 // pred_fallthru
          _
        // Predicated region
        $region21: #{tpu_custom_call.1} parent=15 // pred_check
          %p451 = pneg %p95
        $region22: #{tpu_custom_call.1} parent=15 // pred_check_branch
          %453 = sbr.rel (%p451) target = $region24
        $region23: #{tpu_custom_call.1} parent=15 // pred_region
          %p454 = scmp.lt.s32.totalorder %s45, 1
          %s455 = scalar_select %p454, %s45, 1
          %s456 = smul.addr %s455, 4
          %s457 = smul.addr %s456, 8
          %s458 = scalar_lea.vmem %s1, %s457
        $region24: #{tpu_custom_call.1} parent=15 // pred_fallthru
          _
        // Predicated region
        $region25: #{tpu_custom_call.1} parent=15 // pred_check
          %p459 = pneg %p121
        $region26: #{tpu_custom_call.1} parent=15 // pred_check_branch
          %461 = sbr.rel (%p459) target = $region28
        $region27: #{tpu_custom_call.1} parent=15 // pred_region
          %p462 = scmp.lt.s32.totalorder %s45, 1
          %s463 = scalar_select %p462, %s45, 1
          %s464 = smul.addr %s463, 4
          %s465 = smul.addr %s464, 8
          %s466 = scalar_lea.vmem %s2, %s465
        $region28: #{tpu_custom_call.1} parent=15 // pred_fallthru
          _
        // Predicated region
        $region29: #{tpu_custom_call.1} parent=15 // pred_check
          %p467 = pneg %p147
        $region30: #{tpu_custom_call.1} parent=15 // pred_check_branch
          %469 = sbr.rel (%p467) target = $region32
        $region31: #{tpu_custom_call.1} parent=15 // pred_region
          %p470 = scmp.lt.s32.totalorder %s45, 1
          %s471 = scalar_select %p470, %s45, 1
          %s472 = smul.addr %s471, 4
          %s473 = smul.addr %s472, 8
          %s474 = scalar_lea.vmem %s3, %s473
        $region32: #{tpu_custom_call.1} parent=15 // pred_fallthru
          _
        // Predicated region
        $region33: #{tpu_custom_call.1} parent=15 // pred_check
          %p475 = pneg %p173
        $region34: #{tpu_custom_call.1} parent=15 // pred_check_branch
          %477 = sbr.rel (%p475) target = $region36
        $region35: #{tpu_custom_call.1} parent=15 // pred_region
          %s478 = sand.u32 %s37, 1
          %s479 = scalar_lea.sflag [#allocation6], %s478
          %s480 = sand.u32 %s163, 1
          %s481 = smul.addr %s480, 32
          %s482 = scalar_lea.vmem [#allocation5], %s481
          %484 = vsyncadd %s479, 0
          %s485 = smul.addr %s45, 4
          %s486 = smul.addr %s485, 8
          %s487 = scalar_lea.hbm %s4, %s486
          %s488 = sshll.u32 %s487, 4
          %s489 = int_to_ptr.hbm [resolvable:$true] %s488
          %s490 = sshll.u32 %s482, 4
          %s491 = int_to_ptr.vmem [resolvable:$true] %s490
          %496 = dma.hbm_to_vmem [thread:$0]  %s489, 512, %s491, %s479, 128, 128, 8
        $region36: #{tpu_custom_call.1} parent=15 // pred_fallthru
          _
        // Predicated region
        $region37: #{tpu_custom_call.1} parent=15 // pred_check
          %p497 = pneg %p199
        $region38: #{tpu_custom_call.1} parent=15 // pred_check_branch
          %499 = sbr.rel (%p497) target = $region40
        $region39: #{tpu_custom_call.1} parent=15 // pred_region
          %s500 = sand.u32 %s37, 1
          %s501 = scalar_lea.sflag [#allocation6], %s500
          %s502 = sand.u32 %s189, 1
          %s503 = smul.addr %s502, 32
          %s504 = scalar_lea.vmem [#allocation7], %s503
          %506 = vsyncadd %s501, 0
          %s507 = smul.addr %s45, 4
          %s508 = smul.addr %s507, 8
          %s509 = scalar_lea.hbm %s5, %s508
          %s510 = sshll.u32 %s509, 4
          %s511 = int_to_ptr.hbm [resolvable:$true] %s510
          %s512 = sshll.u32 %s504, 4
          %s513 = int_to_ptr.vmem [resolvable:$true] %s512
          %518 = dma.hbm_to_vmem [thread:$0]  %s511, 512, %s513, %s501, 128, 128, 8
        $region40: #{tpu_custom_call.1} parent=15 // pred_fallthru
          _
        // Predicated region
        $region41: #{tpu_custom_call.1} parent=15 // pred_check
          %p519 = pneg %p225
        $region42: #{tpu_custom_call.1} parent=15 // pred_check_branch
          %521 = sbr.rel (%p519) target = $region44
        $region43: #{tpu_custom_call.1} parent=15 // pred_region
          %s522 = sand.u32 %s37, 1
          %s523 = scalar_lea.sflag [#allocation9], %s522
          %s524 = sand.u32 %s215, 1
          %s525 = smul.addr %s524, 32
          %s526 = scalar_lea.vmem [#allocation8], %s525
          %528 = vsyncadd %s523, 0
          %s529 = smul.addr %s45, 4
          %s530 = smul.addr %s529, 8
          %s531 = scalar_lea.hbm %s6, %s530
          %s532 = sshll.u32 %s531, 4
          %s533 = int_to_ptr.hbm [resolvable:$true] %s532
          %s534 = sshll.u32 %s526, 4
          %s535 = int_to_ptr.vmem [resolvable:$true] %s534
          %540 = dma.hbm_to_vmem [thread:$0]  %s533, 512, %s535, %s523, 128, 128, 8
        $region44: #{tpu_custom_call.1} parent=15 // pred_fallthru
          _
        // Predicated region
        $region45: #{tpu_custom_call.1} parent=15 // pred_check
          %p541 = pneg %p251
        $region46: #{tpu_custom_call.1} parent=15 // pred_check_branch
          %543 = sbr.rel (%p541) target = $region48
        $region47: #{tpu_custom_call.1} parent=15 // pred_region
          %s544 = sand.u32 %s37, 1
          %s545 = scalar_lea.sflag [#allocation9], %s544
          %s546 = sand.u32 %s241, 1
          %s547 = smul.addr %s546, 32
          %s548 = scalar_lea.vmem [#allocation10], %s547
          %550 = vsyncadd %s545, 0
          %s551 = smul.addr %s45, 4
          %s552 = smul.addr %s551, 8
          %s553 = scalar_lea.hbm %s7, %s552
          %s554 = sshll.u32 %s553, 4
          %s555 = int_to_ptr.hbm [resolvable:$true] %s554
          %s556 = sshll.u32 %s548, 4
          %s557 = int_to_ptr.vmem [resolvable:$true] %s556
          %562 = dma.hbm_to_vmem [thread:$0]  %s555, 512, %s557, %s545, 128, 128, 8
        $region48: #{tpu_custom_call.1} parent=15 // pred_fallthru
          _
        // Predicated region
        $region49: #{tpu_custom_call.1} parent=15 // pred_check
          %p563 = pneg %p277
        $region50: #{tpu_custom_call.1} parent=15 // pred_check_branch
          %565 = sbr.rel (%p563) target = $region52
        $region51: #{tpu_custom_call.1} parent=15 // pred_region
          %s566 = sand.u32 %s37, 1
          %s567 = scalar_lea.sflag [#allocation12], %s566
          %s568 = sand.u32 %s267, 1
          %s569 = smul.addr %s568, 32
          %s570 = scalar_lea.vmem [#allocation11], %s569
          %572 = vsyncadd %s567, 0
          %s573 = smul.addr %s45, 4
          %s574 = smul.addr %s573, 8
          %s575 = scalar_lea.hbm %s8, %s574
          %s576 = sshll.u32 %s575, 4
          %s577 = int_to_ptr.hbm [resolvable:$true] %s576
          %s578 = sshll.u32 %s570, 4
          %s579 = int_to_ptr.vmem [resolvable:$true] %s578
          %584 = dma.hbm_to_vmem [thread:$0]  %s577, 512, %s579, %s567, 128, 128, 8
        $region52: #{tpu_custom_call.1} parent=15 // pred_fallthru
          _
        // Predicated region
        $region53: #{tpu_custom_call.1} parent=15 // pred_check
          %p585 = pneg %p303
        $region54: #{tpu_custom_call.1} parent=15 // pred_check_branch
          %587 = sbr.rel (%p585) target = $region56
        $region55: #{tpu_custom_call.1} parent=15 // pred_region
          %s588 = sand.u32 %s37, 1
          %s589 = scalar_lea.sflag [#allocation12], %s588
          %s590 = sand.u32 %s293, 1
          %s591 = smul.addr %s590, 32
          %s592 = scalar_lea.vmem [#allocation13], %s591
          %594 = vsyncadd %s589, 0
          %s595 = smul.addr %s45, 4
          %s596 = smul.addr %s595, 8
          %s597 = scalar_lea.hbm %s9, %s596
          %s598 = sshll.u32 %s597, 4
          %s599 = int_to_ptr.hbm [resolvable:$true] %s598
          %s600 = sshll.u32 %s592, 4
          %s601 = int_to_ptr.vmem [resolvable:$true] %s600
          %606 = dma.hbm_to_vmem [thread:$0]  %s599, 512, %s601, %s589, 128, 128, 8
        $region56: #{tpu_custom_call.1} parent=15 // pred_fallthru
          _
        // Predicated region
        $region57: #{tpu_custom_call.1} parent=15 // pred_check
          %p607 = pneg %p329
        $region58: #{tpu_custom_call.1} parent=15 // pred_check_branch
          %609 = sbr.rel (%p607) target = $region60
        $region59: #{tpu_custom_call.1} parent=15 // pred_region
          %p610 = scmp.lt.s32.totalorder %s45, 1
          %s611 = scalar_select %p610, %s45, 1
          %s612 = smul.addr %s611, 8
          %s613 = smul.addr %s612, 8
          %s614 = scalar_lea.vmem %s10, %s613
        $region60: #{tpu_custom_call.1} parent=15 // pred_fallthru
          _
        // Predicated region
        $region61: #{tpu_custom_call.1} parent=15 // pred_check
          %p615 = pneg %p355
        $region62: #{tpu_custom_call.1} parent=15 // pred_check_branch
          %617 = sbr.rel (%p615) target = $region64
        $region63: #{tpu_custom_call.1} parent=15 // pred_region
          %p618 = scmp.lt.s32.totalorder %s45, 1
          %s619 = scalar_select %p618, %s45, 1
          %s620 = scalar_lea.vmem %s11, %s619
        $region64: #{tpu_custom_call.1} parent=15 // pred_fallthru
          _
        // Predicated region
        $region65: #{tpu_custom_call.1} parent=15 // pred_check
          %p621 = pneg %p381
        $region66: #{tpu_custom_call.1} parent=15 // pred_check_branch
          %623 = sbr.rel (%p621) target = $region68
        $region67: #{tpu_custom_call.1} parent=15 // pred_region
          %s624 = sand.u32 %s371, 1
          %s625 = scalar_lea.sflag [#allocation15], %s624
          %s626 = sand.u32 %s371, 1
          %s627 = smul.addr %s626, 16
          %s628 = scalar_lea.vmem [#allocation14], %s627
          %630 = vsyncadd %s625, 0
          %s631 = smul.addr %s45, 2
          %s632 = smul.addr %s631, 8
          %s633 = scalar_lea.hbm %s12, %s632
          %s634 = sshll.u32 %s633, 4
          %s635 = int_to_ptr.hbm [resolvable:$true] %s634
          %s636 = sshll.u32 %s628, 4
          %s637 = int_to_ptr.vmem [resolvable:$true] %s636
          %642 = dma.hbm_to_vmem [thread:$0]  %s635, 256, %s637, %s625, 128, 128, 8
        $region68: #{tpu_custom_call.1} parent=15 // pred_fallthru
          _
      $region16: #{tpu_custom_call.1} parent=5 // pred_fallthru
        _
      %p643 = scmp.le.s32.totalorder 1, %s37
      %p644 = scmp.lt.s32.totalorder %s37, 5
      %p645 = pnand %p643, %p644
      %p646 = pneg %p645
      // Predicated region
      $region69: #{tpu_custom_call.1} parent=5 // pred_check
        _
      $region70: #{tpu_custom_call.1} parent=5 // pred_check_branch
        %648 = sbr.rel (%p645) target = $region72
      $region71: #{tpu_custom_call.1} parent=5 // pred_region
        %s649 = ssub.s32 %s37, 1
        %s650 = sand.u32 %s62, 1
        %s651 = scalar_lea.sflag [#allocation3], %s650
        %s652 = sand.u32 %s62, 1
        %s653 = smul.addr %s652, 8
        %s654 = scalar_lea.vmem [#allocation2], %s653
        // Predicated region
        $region73: #{tpu_custom_call.1} parent=71 // pred_check
          %p655 = pneg %p75
        $region74: #{tpu_custom_call.1} parent=71 // pred_check_branch
          %657 = sbr.rel (%p655) target = $region76
        $region75: #{tpu_custom_call.1} parent=71 // pred_region
          %659 = dma.done %s651, 128
        $region76: #{tpu_custom_call.1} parent=71 // pred_fallthru
          _
        %s660 = sand.u32 %s42, 1
        %s661 = scalar_lea.sflag [#allocation6], %s660
        %s662 = sand.u32 %s166, 1
        %s663 = smul.addr %s662, 32
        %s664 = scalar_lea.vmem [#allocation5], %s663
        // Predicated region
        $region77: #{tpu_custom_call.1} parent=71 // pred_check
          %p665 = pneg %p179
        $region78: #{tpu_custom_call.1} parent=71 // pred_check_branch
          %667 = sbr.rel (%p665) target = $region80
        $region79: #{tpu_custom_call.1} parent=71 // pred_region
          %669 = dma.done %s661, 512
        $region80: #{tpu_custom_call.1} parent=71 // pred_fallthru
          _
        %s670 = sand.u32 %s42, 1
        %s671 = scalar_lea.sflag [#allocation6], %s670
        %s672 = sand.u32 %s192, 1
        %s673 = smul.addr %s672, 32
        %s674 = scalar_lea.vmem [#allocation7], %s673
        // Predicated region
        $region81: #{tpu_custom_call.1} parent=71 // pred_check
          %p675 = pneg %p205
        $region82: #{tpu_custom_call.1} parent=71 // pred_check_branch
          %677 = sbr.rel (%p675) target = $region84
        $region83: #{tpu_custom_call.1} parent=71 // pred_region
          %679 = dma.done %s671, 512
        $region84: #{tpu_custom_call.1} parent=71 // pred_fallthru
          _
        %s680 = sand.u32 %s42, 1
        %s681 = scalar_lea.sflag [#allocation9], %s680
        %s682 = sand.u32 %s218, 1
        %s683 = smul.addr %s682, 32
        %s684 = scalar_lea.vmem [#allocation8], %s683
        // Predicated region
        $region85: #{tpu_custom_call.1} parent=71 // pred_check
          %p685 = pneg %p231
        $region86: #{tpu_custom_call.1} parent=71 // pred_check_branch
          %687 = sbr.rel (%p685) target = $region88
        $region87: #{tpu_custom_call.1} parent=71 // pred_region
          %689 = dma.done %s681, 512
        $region88: #{tpu_custom_call.1} parent=71 // pred_fallthru
          _
        %s690 = sand.u32 %s42, 1
        %s691 = scalar_lea.sflag [#allocation9], %s690
        %s692 = sand.u32 %s244, 1
        %s693 = smul.addr %s692, 32
        %s694 = scalar_lea.vmem [#allocation10], %s693
        // Predicated region
        $region89: #{tpu_custom_call.1} parent=71 // pred_check
          %p695 = pneg %p257
        $region90: #{tpu_custom_call.1} parent=71 // pred_check_branch
          %697 = sbr.rel (%p695) target = $region92
        $region91: #{tpu_custom_call.1} parent=71 // pred_region
          %699 = dma.done %s691, 512
        $region92: #{tpu_custom_call.1} parent=71 // pred_fallthru
          _
        %s700 = sand.u32 %s42, 1
        %s701 = scalar_lea.sflag [#allocation12], %s700
        %s702 = sand.u32 %s270, 1
        %s703 = smul.addr %s702, 32
        %s704 = scalar_lea.vmem [#allocation11], %s703
        // Predicated region
        $region93: #{tpu_custom_call.1} parent=71 // pred_check
          %p705 = pneg %p283
        $region94: #{tpu_custom_call.1} parent=71 // pred_check_branch
          %707 = sbr.rel (%p705) target = $region96
        $region95: #{tpu_custom_call.1} parent=71 // pred_region
          %709 = dma.done %s701, 512
        $region96: #{tpu_custom_call.1} parent=71 // pred_fallthru
          _
        %s710 = sand.u32 %s42, 1
        %s711 = scalar_lea.sflag [#allocation12], %s710
        %s712 = sand.u32 %s296, 1
        %s713 = smul.addr %s712, 32
        %s714 = scalar_lea.vmem [#allocation13], %s713
        // Predicated region
        $region97: #{tpu_custom_call.1} parent=71 // pred_check
          %p715 = pneg %p309
        $region98: #{tpu_custom_call.1} parent=71 // pred_check_branch
          %717 = sbr.rel (%p715) target = $region100
        $region99: #{tpu_custom_call.1} parent=71 // pred_region
          %719 = dma.done %s711, 512
        $region100: #{tpu_custom_call.1} parent=71 // pred_fallthru
          _
        %s720 = sand.u32 %s374, 1
        %s721 = scalar_lea.sflag [#allocation15], %s720
        %s722 = sand.u32 %s374, 1
        %s723 = smul.addr %s722, 16
        %s724 = scalar_lea.vmem [#allocation14], %s723
        // Predicated region
        $region101: #{tpu_custom_call.1} parent=71 // pred_check
          %p725 = pneg %p387
        $region102: #{tpu_custom_call.1} parent=71 // pred_check_branch
          %727 = sbr.rel (%p725) target = $region104
        $region103: #{tpu_custom_call.1} parent=71 // pred_region
          %729 = dma.done %s721, 256
        $region104: #{tpu_custom_call.1} parent=71 // pred_fallthru
          _
        %s730 = sand.u32 %s62, 1
        %s731 = scalar_lea.sflag [#allocation3], %s730
        %s732 = sand.u32 %s62, 1
        %s733 = smul.addr %s732, 8
        %s734 = scalar_lea.vmem [#allocation2], %s733
        %p735 = pneg %p75
        %p736 = pneg %p72
        %p737 = scmp.lt.s32.totalorder %s47, 1
        %s738 = scalar_select %p737, %s47, 1
        %s739 = smul.addr %s738, 4
        %s740 = smul.addr %s739, 8
        %s741 = scalar_lea.vmem %s1, %s740
        %p742 = pneg %p101
        %p743 = pneg %p98
        %p744 = scmp.lt.s32.totalorder %s47, 1
        %s745 = scalar_select %p744, %s47, 1
        %s746 = smul.addr %s745, 4
        %s747 = smul.addr %s746, 8
        %s748 = scalar_lea.vmem %s2, %s747
        %p749 = pneg %p127
        %p750 = pneg %p124
        %p751 = scmp.lt.s32.totalorder %s47, 1
        %s752 = scalar_select %p751, %s47, 1
        %s753 = smul.addr %s752, 4
        %s754 = smul.addr %s753, 8
        %s755 = scalar_lea.vmem %s3, %s754
        %p756 = pneg %p153
        %p757 = pneg %p150
        %s758 = sand.u32 %s42, 1
        %s759 = scalar_lea.sflag [#allocation6], %s758
        %s760 = sand.u32 %s166, 1
        %s761 = smul.addr %s760, 32
        %s762 = scalar_lea.vmem [#allocation5], %s761
        %p763 = pneg %p179
        %p764 = pneg %p176
        %s765 = sand.u32 %s42, 1
        %s766 = scalar_lea.sflag [#allocation6], %s765
        %s767 = sand.u32 %s192, 1
        %s768 = smul.addr %s767, 32
        %s769 = scalar_lea.vmem [#allocation7], %s768
        %p770 = pneg %p205
        %p771 = pneg %p202
        %s772 = sand.u32 %s42, 1
        %s773 = scalar_lea.sflag [#allocation9], %s772
        %s774 = sand.u32 %s218, 1
        %s775 = smul.addr %s774, 32
        %s776 = scalar_lea.vmem [#allocation8], %s775
        %p777 = pneg %p231
        %p778 = pneg %p228
        %s779 = sand.u32 %s42, 1
        %s780 = scalar_lea.sflag [#allocation9], %s779
        %s781 = sand.u32 %s244, 1
        %s782 = smul.addr %s781, 32
        %s783 = scalar_lea.vmem [#allocation10], %s782
        %p784 = pneg %p257
        %p785 = pneg %p254
        %s786 = sand.u32 %s42, 1
        %s787 = scalar_lea.sflag [#allocation12], %s786
        %s788 = sand.u32 %s270, 1
        %s789 = smul.addr %s788, 32
        %s790 = scalar_lea.vmem [#allocation11], %s789
        %p791 = pneg %p283
        %p792 = pneg %p280
        %s793 = sand.u32 %s42, 1
        %s794 = scalar_lea.sflag [#allocation12], %s793
        %s795 = sand.u32 %s296, 1
        %s796 = smul.addr %s795, 32
        %s797 = scalar_lea.vmem [#allocation13], %s796
        %p798 = pneg %p309
        %p799 = pneg %p306
        %p800 = scmp.lt.s32.totalorder %s47, 1
        %s801 = scalar_select %p800, %s47, 1
        %s802 = smul.addr %s801, 8
        %s803 = smul.addr %s802, 8
        %s804 = scalar_lea.vmem %s10, %s803
        %p805 = pneg %p335
        %p806 = pneg %p332
        %p807 = scmp.lt.s32.totalorder %s47, 1
        %s808 = scalar_select %p807, %s47, 1
        %s809 = scalar_lea.vmem %s11, %s808
        %p810 = pneg %p361
        %p811 = pneg %p358
        %s812 = sand.u32 %s374, 1
        %s813 = scalar_lea.sflag [#allocation15], %s812
        %s814 = sand.u32 %s374, 1
        %s815 = smul.addr %s814, 16
        %s816 = scalar_lea.vmem [#allocation14], %s815
        %p817 = pneg %p387
        %p818 = pneg %p384
        %p819 = pneg %p413
        %p820 = pneg %p410
        %s821 = sand.u32 %s400, 1
        %s822 = scalar_lea.sflag [#allocation4], %s821
        %s823 = sand.u32 %s400, 1
        %s824 = smul.addr %s823, 8
        %s825 = scalar_lea.vmem [#allocation16], %s824
        %p826 = scmp.lt.s32.totalorder %s47, 1
        %s827 = scalar_select %p826, %s47, 1
        %s828 = smul.addr %s827, 4
        %s829 = smul.addr %s828, 8
        %s830 = scalar_lea.vmem %s1, %s829
        %p831 = scmp.lt.s32.totalorder %s47, 1
        %s832 = scalar_select %p831, %s47, 1
        %s833 = smul.addr %s832, 4
        %s834 = smul.addr %s833, 8
        %s835 = scalar_lea.vmem %s2, %s834
        %p836 = scmp.lt.s32.totalorder %s47, 1
        %s837 = scalar_select %p836, %s47, 1
        %s838 = smul.addr %s837, 4
        %s839 = smul.addr %s838, 8
        %s840 = scalar_lea.vmem %s3, %s839
        %p841 = scmp.lt.s32.totalorder %s47, 1
        %s842 = scalar_select %p841, %s47, 1
        %s843 = smul.addr %s842, 8
        %s844 = smul.addr %s843, 8
        %s845 = scalar_lea.vmem %s10, %s844
        %p846 = scmp.lt.s32.totalorder %s47, 1
        %s847 = scalar_select %p846, %s47, 1
        %s848 = scalar_lea.vmem %s11, %s847
        %p849 = scmp.eq.s32.totalorder %s47, 0
        // Predicated region
        $region105: #{tpu_custom_call.1} parent=71 // pred_check
          %p850 = pneg %p849
        $region106: #{tpu_custom_call.1} parent=71 // pred_check_branch
          %852 = sbr.rel (%p850) target = $region108
        $region107: #{tpu_custom_call.1} parent=71 // pred_region
          %v853 = vld [vmem:[%s654] sm:$0xff]
          %vm854 = vcmask 261120
          %855 = vst.msk [vmem:[%s825] sm:$0xff] %vm854, %v853
        $region108: #{tpu_custom_call.1} parent=71 // pred_fallthru
          _
        %v856 = vld [vmem:[%s825] sm:$0xff]
        %v857 = vld [vmem:[%s724] sm:$0xff]
        %v858 = vld [vmem:[%s724 + $0x8] sm:$0xff]
        %v859 = vld [vmem:[%s848] sm:$0x1]
        %v860 = vld [vmem:[%s830] sm:$0xff]
        %v861 = vld [vmem:[%s830 + $0x8] sm:$0xff]
        %v862 = vld [vmem:[%s830 + $0x10] sm:$0xff]
        %v863 = vld [vmem:[%s830 + $0x18] sm:$0xff]
        %v864 = vperm.slane %v857, 0
        %vm865 = vcmask 261120
        %v867 = vsel %vm865, %v856, 0
        %869 = vmatpush.msra.mxu0 0.0
        %870 = vmatpush.msra.mxu0 0.0
        %871 = vmatpush.msra.mxu0 0.0
        %872 = vmatpush.msra.mxu0 0.0
        %873 = vmatpush.msra.mxu0 0.0
        %874 = vmatpush.msra.mxu0 0.0
        %875 = vmatpush.msra.mxu0 0.0
        %876 = vmatpush.msra.mxu0 0.0
        %877 = vmatpush.msra.mxu0 0.0
        %878 = vmatpush.msra.mxu0 0.0
        %879 = vmatpush.msra.mxu0 0.0
        %880 = vmatpush.msra.mxu0 0.0
        %881 = vmatpush.msra.mxu0 %v863
        %882 = vmatpush.msra.mxu0 %v862
        %883 = vmatpush.msra.mxu0 %v861
        %884 = vmatpush.msra.mxu0 %v860
        %885 = vmatmul.f32.gmra.mxu0 %v867
        %v886 = vpop.f32.mrf.mxu0
        %v887 = vadd.f32 %v864, %v886
        %888 = vdwg.mxu0
        %v889 = vld [vmem:[%s835] sm:$0xff]
        %v890 = vld [vmem:[%s835 + $0x8] sm:$0xff]
        %v891 = vld [vmem:[%s835 + $0x10] sm:$0xff]
        %v892 = vld [vmem:[%s835 + $0x18] sm:$0xff]
        %v893 = vperm.slane %v857, 1
        %894 = vmatpush.msra.mxu0 0.0
        %895 = vmatpush.msra.mxu0 0.0
        %896 = vmatpush.msra.mxu0 0.0
        %897 = vmatpush.msra.mxu0 0.0
        %898 = vmatpush.msra.mxu0 0.0
        %899 = vmatpush.msra.mxu0 0.0
        %900 = vmatpush.msra.mxu0 0.0
        %901 = vmatpush.msra.mxu0 0.0
        %902 = vmatpush.msra.mxu0 0.0
        %903 = vmatpush.msra.mxu0 0.0
        %904 = vmatpush.msra.mxu0 0.0
        %905 = vmatpush.msra.mxu0 0.0
        %906 = vmatpush.msra.mxu0 %v892
        %907 = vmatpush.msra.mxu0 %v891
        %908 = vmatpush.msra.mxu0 %v890
        %909 = vmatpush.msra.mxu0 %v889
        %910 = vmatmul.f32.gmra.mxu0 %v867
        %v911 = vpop.f32.mrf.mxu0
        %v912 = vadd.f32 %v893, %v911
        %913 = vdwg.mxu0
        %v914 = vld [vmem:[%s840] sm:$0xff]
        %v915 = vld [vmem:[%s840 + $0x8] sm:$0xff]
        %v916 = vld [vmem:[%s840 + $0x10] sm:$0xff]
        %v917 = vld [vmem:[%s840 + $0x18] sm:$0xff]
        %v918 = vperm.slane %v857, 2
        %919 = vmatpush.msra.mxu0 0.0
        %920 = vmatpush.msra.mxu0 0.0
        %921 = vmatpush.msra.mxu0 0.0
        %922 = vmatpush.msra.mxu0 0.0
        %923 = vmatpush.msra.mxu0 0.0
        %924 = vmatpush.msra.mxu0 0.0
        %925 = vmatpush.msra.mxu0 0.0
        %926 = vmatpush.msra.mxu0 0.0
        %927 = vmatpush.msra.mxu0 0.0
        %928 = vmatpush.msra.mxu0 0.0
        %929 = vmatpush.msra.mxu0 0.0
        %930 = vmatpush.msra.mxu0 0.0
        %931 = vmatpush.msra.mxu0 %v917
        %932 = vmatpush.msra.mxu0 %v916
        %933 = vmatpush.msra.mxu0 %v915
        %934 = vmatpush.msra.mxu0 %v914
        %935 = vmatmul.f32.gmra.mxu0 %v867
        %v936 = vpop.f32.mrf.mxu0
        %v937 = vadd.f32 %v918, %v936
        %938 = vdwg.mxu0
        %vm939 = vcmask 64512
        %v941 = vsel %vm939, %v887, 0
        %v944 = vsel %vm939, %v912, 0
        %946 = vmatpush.xpose.msra.mxu0 0.0
        %947 = vmatpush.xpose.msra.mxu0 0.0
        %948 = vmatpush.xpose.msra.mxu0 0.0
        %949 = vmatpush.xpose.msra.mxu0 0.0
        %950 = vmatpush.xpose.msra.mxu0 0.0
        %951 = vmatpush.xpose.msra.mxu0 0.0
        %952 = vmatpush.xpose.msra.mxu0 0.0
        %953 = vmatpush.xpose.msra.mxu0 0.0
        %954 = vmatpush.xpose.msra.mxu0 0.0
        %955 = vmatpush.xpose.msra.mxu0 0.0
        %956 = vmatpush.xpose.msra.mxu0 0.0
        %957 = vmatpush.xpose.msra.mxu0 0.0
        %958 = vmatpush.xpose.msra.mxu0 0.0
        %959 = vmatpush.xpose.msra.mxu0 0.0
        %960 = vmatpush.xpose.msra.mxu0 0.0
        %961 = vmatpush.xpose.msra.mxu0 %v944
        %962 = vmatmul.f32.gmra.mxu0 %v941
        %v963 = vpop.f32.mrf.mxu0
        %v964 = vadd.f32 0.0, %v963
        %965 = vdwg.mxu0
        %v966 = vmul.f32 %v964, 0.35355338
        %v967 = vmul.f32 %v966, 1.442695
        %v968 = vpow.pop %v967
        %v969 = vsel %vm939, %v968, 0.0
        %970 = vadd.xlane.f32.xlu0 %v969
        %v971 = vpop.xlane.xlu0 %970
        %v972 = vrcp.pop %v971
        %v973 = vmul.f32 %v971, %v972
        %v974 = vsub.f32 1.0, %v973
        %v975 = vmul.f32 %v972, %v974
        %v976 = vadd.f32 %v972, %v975
        %vm977 = vweird.f32 %v971
        %vm978 = vweird.f32 %v972
        %vm979 = vmor %vm977, %vm978
        %v980 = vsel %vm979, %v972, %v976
        %v981 = vand.u32 2147483647, %v971
        %vm982 = vcmp.eq.f32.partialorder %v981, 8.507059e+37
        %v983 = vand.u32 %v971, 2147483648
        %v984 = vor.u32 1.1754944e-38, %v983
        %v985 = vsel %vm982, %v984, %v980
        %v986 = vmul.f32 %v968, %v985
        %v988 = vsel %vm939, %v986, 0
        %990 = vmatpush.msra.mxu0 0.0
        %991 = vmatpush.msra.mxu0 0.0
        %992 = vmatpush.msra.mxu0 0.0
        %993 = vmatpush.msra.mxu0 0.0
        %994 = vmatpush.msra.mxu0 0.0
        %995 = vmatpush.msra.mxu0 0.0
        %996 = vmatpush.msra.mxu0 0.0
        %997 = vmatpush.msra.mxu0 0.0
        %998 = vmatpush.msra.mxu0 0.0
        %999 = vmatpush.msra.mxu0 0.0
        %1000 = vmatpush.msra.mxu0 0.0
        %1001 = vmatpush.msra.mxu0 0.0
        %1002 = vmatpush.msra.mxu0 0.0
        %1003 = vmatpush.msra.mxu0 0.0
        %1004 = vmatpush.msra.mxu0 0.0
        %1005 = vmatpush.msra.mxu0 %v937
        %1006 = vmatmul.f32.gmra.mxu0 %v988
        %v1007 = vpop.f32.mrf.mxu0
        %v1008 = vadd.f32 0.0, %v1007
        %1009 = vdwg.mxu0
        %1010 = vrot.lane.b32.xlu0 %v887, 120
        %v1011 = vpop.permute.xlu0 %1010
        %1012 = vrot.lane.b32.xlu0 %v912, 120
        %v1013 = vpop.permute.xlu0 %1012
        %v1014 = vsel %vm939, %v1011, 0
        %v1016 = vsel %vm939, %v1013, 0
        %1018 = vmatpush.xpose.msra.mxu0 0.0
        %1019 = vmatpush.xpose.msra.mxu0 0.0
        %1020 = vmatpush.xpose.msra.mxu0 0.0
        %1021 = vmatpush.xpose.msra.mxu0 0.0
        %1022 = vmatpush.xpose.msra.mxu0 0.0
        %1023 = vmatpush.xpose.msra.mxu0 0.0
        %1024 = vmatpush.xpose.msra.mxu0 0.0
        %1025 = vmatpush.xpose.msra.mxu0 0.0
        %1026 = vmatpush.xpose.msra.mxu0 0.0
        %1027 = vmatpush.xpose.msra.mxu0 0.0
        %1028 = vmatpush.xpose.msra.mxu0 0.0
        %1029 = vmatpush.xpose.msra.mxu0 0.0
        %1030 = vmatpush.xpose.msra.mxu0 0.0
        %1031 = vmatpush.xpose.msra.mxu0 0.0
        %1032 = vmatpush.xpose.msra.mxu0 0.0
        %1033 = vmatpush.xpose.msra.mxu0 %v1016
        %1034 = vmatmul.f32.gmra.mxu0 %v1014
        %v1035 = vpop.f32.mrf.mxu0
        %v1036 = vadd.f32 0.0, %v1035
        %1037 = vdwg.mxu0
        %v1038 = vmul.f32 %v1036, 0.35355338
        %v1039 = vmul.f32 %v1038, 1.442695
        %v1040 = vpow.pop %v1039
        %v1041 = vsel %vm939, %v1040, 0.0
        %1042 = vadd.xlane.f32.xlu0 %v1041
        %v1043 = vpop.xlane.xlu0 %1042
        %v1044 = vrcp.pop %v1043
        %v1045 = vmul.f32 %v1043, %v1044
        %v1046 = vsub.f32 1.0, %v1045
        %v1047 = vmul.f32 %v1044, %v1046
        %v1048 = vadd.f32 %v1044, %v1047
        %vm1049 = vweird.f32 %v1043
        %vm1050 = vweird.f32 %v1044
        %vm1051 = vmor %vm1049, %vm1050
        %v1052 = vsel %vm1051, %v1044, %v1048
        %v1053 = vand.u32 2147483647, %v1043
        %vm1054 = vcmp.eq.f32.partialorder %v1053, 8.507059e+37
        %v1055 = vand.u32 %v1043, 2147483648
        %v1056 = vor.u32 1.1754944e-38, %v1055
        %v1057 = vsel %vm1054, %v1056, %v1052
        %v1058 = vmul.f32 %v1040, %v1057
        %1060 = vrot.lane.b32.xlu0 %v937, 120
        %v1061 = vpop.permute.xlu0 %1060
        %v1064 = vsel %vm939, %v1058, 0
        %1066 = vmatpush.msra.mxu0 0.0
        %1067 = vmatpush.msra.mxu0 0.0
        %1068 = vmatpush.msra.mxu0 0.0
        %1069 = vmatpush.msra.mxu0 0.0
        %1070 = vmatpush.msra.mxu0 0.0
        %1071 = vmatpush.msra.mxu0 0.0
        %1072 = vmatpush.msra.mxu0 0.0
        %1073 = vmatpush.msra.mxu0 0.0
        %1074 = vmatpush.msra.mxu0 0.0
        %1075 = vmatpush.msra.mxu0 0.0
        %1076 = vmatpush.msra.mxu0 0.0
        %1077 = vmatpush.msra.mxu0 0.0
        %1078 = vmatpush.msra.mxu0 0.0
        %1079 = vmatpush.msra.mxu0 0.0
        %1080 = vmatpush.msra.mxu0 0.0
        %1081 = vmatpush.msra.mxu0 %v1061
        %1082 = vmatmul.f32.gmra.mxu0 %v1064
        %v1083 = vpop.f32.mrf.mxu0
        %v1084 = vadd.f32 0.0, %v1083
        %1085 = vdwg.mxu0
        %1086 = vrot.lane.b32.xlu0 %v887, 112
        %v1087 = vpop.permute.xlu0 %1086
        %1088 = vrot.lane.b32.xlu0 %v912, 112
        %v1089 = vpop.permute.xlu0 %1088
        %v1090 = vsel %vm939, %v1087, 0
        %v1092 = vsel %vm939, %v1089, 0
        %1094 = vmatpush.xpose.msra.mxu0 0.0
        %1095 = vmatpush.xpose.msra.mxu0 0.0
        %1096 = vmatpush.xpose.msra.mxu0 0.0
        %1097 = vmatpush.xpose.msra.mxu0 0.0
        %1098 = vmatpush.xpose.msra.mxu0 0.0
        %1099 = vmatpush.xpose.msra.mxu0 0.0
        %1100 = vmatpush.xpose.msra.mxu0 0.0
        %1101 = vmatpush.xpose.msra.mxu0 0.0
        %1102 = vmatpush.xpose.msra.mxu0 0.0
        %1103 = vmatpush.xpose.msra.mxu0 0.0
        %1104 = vmatpush.xpose.msra.mxu0 0.0
        %1105 = vmatpush.xpose.msra.mxu0 0.0
        %1106 = vmatpush.xpose.msra.mxu0 0.0
        %1107 = vmatpush.xpose.msra.mxu0 0.0
        %1108 = vmatpush.xpose.msra.mxu0 0.0
        %1109 = vmatpush.xpose.msra.mxu0 %v1092
        %1110 = vmatmul.f32.gmra.mxu0 %v1090
        %v1111 = vpop.f32.mrf.mxu0
        %v1112 = vadd.f32 0.0, %v1111
        %1113 = vdwg.mxu0
        %v1114 = vmul.f32 %v1112, 0.35355338
        %v1115 = vmul.f32 %v1114, 1.442695
        %v1116 = vpow.pop %v1115
        %v1117 = vsel %vm939, %v1116, 0.0
        %1118 = vadd.xlane.f32.xlu0 %v1117
        %v1119 = vpop.xlane.xlu0 %1118
        %v1120 = vrcp.pop %v1119
        %v1121 = vmul.f32 %v1119, %v1120
        %v1122 = vsub.f32 1.0, %v1121
        %v1123 = vmul.f32 %v1120, %v1122
        %v1124 = vadd.f32 %v1120, %v1123
        %vm1125 = vweird.f32 %v1119
        %vm1126 = vweird.f32 %v1120
        %vm1127 = vmor %vm1125, %vm1126
        %v1128 = vsel %vm1127, %v1120, %v1124
        %v1129 = vand.u32 2147483647, %v1119
        %vm1130 = vcmp.eq.f32.partialorder %v1129, 8.507059e+37
        %v1131 = vand.u32 %v1119, 2147483648
        %v1132 = vor.u32 1.1754944e-38, %v1131
        %v1133 = vsel %vm1130, %v1132, %v1128
        %v1134 = vmul.f32 %v1116, %v1133
        %1135 = vrot.lane.b32.xlu0 %v937, 112
        %v1136 = vpop.permute.xlu0 %1135
        %v1139 = vsel %vm939, %v1134, 0
        %1141 = vmatpush.msra.mxu0 0.0
        %1142 = vmatpush.msra.mxu0 0.0
        %1143 = vmatpush.msra.mxu0 0.0
        %1144 = vmatpush.msra.mxu0 0.0
        %1145 = vmatpush.msra.mxu0 0.0
        %1146 = vmatpush.msra.mxu0 0.0
        %1147 = vmatpush.msra.mxu0 0.0
        %1148 = vmatpush.msra.mxu0 0.0
        %1149 = vmatpush.msra.mxu0 0.0
        %1150 = vmatpush.msra.mxu0 0.0
        %1151 = vmatpush.msra.mxu0 0.0
        %1152 = vmatpush.msra.mxu0 0.0
        %1153 = vmatpush.msra.mxu0 0.0
        %1154 = vmatpush.msra.mxu0 0.0
        %1155 = vmatpush.msra.mxu0 0.0
        %1156 = vmatpush.msra.mxu0 %v1136
        %1157 = vmatmul.f32.gmra.mxu0 %v1139
        %v1158 = vpop.f32.mrf.mxu0
        %v1159 = vadd.f32 0.0, %v1158
        %1160 = vdwg.mxu0
        %1161 = vrot.lane.b32.xlu0 %v887, 104
        %v1162 = vpop.permute.xlu0 %1161
        %1163 = vrot.lane.b32.xlu0 %v912, 104
        %v1164 = vpop.permute.xlu0 %1163
        %v1165 = vsel %vm939, %v1162, 0
        %v1167 = vsel %vm939, %v1164, 0
        %1169 = vmatpush.xpose.msra.mxu0 0.0
        %1170 = vmatpush.xpose.msra.mxu0 0.0
        %1171 = vmatpush.xpose.msra.mxu0 0.0
        %1172 = vmatpush.xpose.msra.mxu0 0.0
        %1173 = vmatpush.xpose.msra.mxu0 0.0
        %1174 = vmatpush.xpose.msra.mxu0 0.0
        %1175 = vmatpush.xpose.msra.mxu0 0.0
        %1176 = vmatpush.xpose.msra.mxu0 0.0
        %1177 = vmatpush.xpose.msra.mxu0 0.0
        %1178 = vmatpush.xpose.msra.mxu0 0.0
        %1179 = vmatpush.xpose.msra.mxu0 0.0
        %1180 = vmatpush.xpose.msra.mxu0 0.0
        %1181 = vmatpush.xpose.msra.mxu0 0.0
        %1182 = vmatpush.xpose.msra.mxu0 0.0
        %1183 = vmatpush.xpose.msra.mxu0 0.0
        %1184 = vmatpush.xpose.msra.mxu0 %v1167
        %1185 = vmatmul.f32.gmra.mxu0 %v1165
        %v1186 = vpop.f32.mrf.mxu0
        %v1187 = vadd.f32 0.0, %v1186
        %1188 = vdwg.mxu0
        %v1189 = vmul.f32 %v1187, 0.35355338
        %v1190 = vmul.f32 %v1189, 1.442695
        %v1191 = vpow.pop %v1190
        %v1192 = vsel %vm939, %v1191, 0.0
        %1193 = vadd.xlane.f32.xlu0 %v1192
        %v1194 = vpop.xlane.xlu0 %1193
        %v1195 = vrcp.pop %v1194
        %v1196 = vmul.f32 %v1194, %v1195
        %v1197 = vsub.f32 1.0, %v1196
        %v1198 = vmul.f32 %v1195, %v1197
        %v1199 = vadd.f32 %v1195, %v1198
        %vm1200 = vweird.f32 %v1194
        %vm1201 = vweird.f32 %v1195
        %vm1202 = vmor %vm1200, %vm1201
        %v1203 = vsel %vm1202, %v1195, %v1199
        %v1204 = vand.u32 2147483647, %v1194
        %vm1205 = vcmp.eq.f32.partialorder %v1204, 8.507059e+37
        %v1206 = vand.u32 %v1194, 2147483648
        %v1207 = vor.u32 1.1754944e-38, %v1206
        %v1208 = vsel %vm1205, %v1207, %v1203
        %v1209 = vmul.f32 %v1191, %v1208
        %1210 = vrot.lane.b32.xlu0 %v937, 104
        %v1211 = vpop.permute.xlu0 %1210
        %v1214 = vsel %vm939, %v1209, 0
        %1216 = vmatpush.msra.mxu0 0.0
        %1217 = vmatpush.msra.mxu0 0.0
        %1218 = vmatpush.msra.mxu0 0.0
        %1219 = vmatpush.msra.mxu0 0.0
        %1220 = vmatpush.msra.mxu0 0.0
        %1221 = vmatpush.msra.mxu0 0.0
        %1222 = vmatpush.msra.mxu0 0.0
        %1223 = vmatpush.msra.mxu0 0.0
        %1224 = vmatpush.msra.mxu0 0.0
        %1225 = vmatpush.msra.mxu0 0.0
        %1226 = vmatpush.msra.mxu0 0.0
        %1227 = vmatpush.msra.mxu0 0.0
        %1228 = vmatpush.msra.mxu0 0.0
        %1229 = vmatpush.msra.mxu0 0.0
        %1230 = vmatpush.msra.mxu0 0.0
        %1231 = vmatpush.msra.mxu0 %v1211
        %1232 = vmatmul.f32.gmra.mxu0 %v1214
        %v1233 = vpop.f32.mrf.mxu0
        %v1234 = vadd.f32 0.0, %v1233
        %1235 = vdwg.mxu0
        %1237 = vrot.lane.b32.xlu0 %v1084, 8
        %v1238 = vpop.permute.xlu0 %1237
        %1241 = vrot.lane.b32.xlu0 %v1159, 16
        %v1242 = vpop.permute.xlu0 %1241
        %1245 = vrot.lane.b32.xlu0 %v1234, 24
        %v1246 = vpop.permute.xlu0 %1245
        %v1248 = vsel %vm939, %v1008, %v1238
        %vm1249 = vcmask 130048
        %v1250 = vsel %vm1249, %v1248, %v1242
        %vm1251 = vcmask 195584
        %v1252 = vsel %vm1251, %v1250, %v1246
        %v1253 = vld [vmem:[%s664] sm:$0xff]
        %v1254 = vld [vmem:[%s664 + $0x8] sm:$0xff]
        %v1255 = vld [vmem:[%s664 + $0x10] sm:$0xff]
        %v1256 = vld [vmem:[%s664 + $0x18] sm:$0xff]
        %v1257 = vperm.slane %v857, 3
        %v1259 = vsel %vm865, %v1252, 0
        %1261 = vmatpush.msra.mxu0 0.0
        %1262 = vmatpush.msra.mxu0 0.0
        %1263 = vmatpush.msra.mxu0 0.0
        %1264 = vmatpush.msra.mxu0 0.0
        %1265 = vmatpush.msra.mxu0 0.0
        %1266 = vmatpush.msra.mxu0 0.0
        %1267 = vmatpush.msra.mxu0 0.0
        %1268 = vmatpush.msra.mxu0 0.0
        %1269 = vmatpush.msra.mxu0 0.0
        %1270 = vmatpush.msra.mxu0 0.0
        %1271 = vmatpush.msra.mxu0 0.0
        %1272 = vmatpush.msra.mxu0 0.0
        %1273 = vmatpush.msra.mxu0 %v1256
        %1274 = vmatpush.msra.mxu0 %v1255
        %1275 = vmatpush.msra.mxu0 %v1254
        %1276 = vmatpush.msra.mxu0 %v1253
        %1277 = vmatmul.f32.gmra.mxu0 %v1259
        %v1278 = vpop.f32.mrf.mxu0
        %v1279 = vadd.f32 %v1257, %v1278
        %1280 = vdwg.mxu0
        %v1281 = vsel %vm865, %v1279, 0.0
        %1282 = vadd.xlane.f32.xlu0 %v1281
        %v1283 = vpop.xlane.xlu0 %1282
        %v1284 = vrcp.pop 32.0
        %v1285 = vmul.f32 32.0, %v1284
        %v1286 = vsub.f32 1.0, %v1285
        %v1287 = vmul.f32 %v1284, %v1286
        %v1288 = vadd.f32 %v1284, %v1287
        %vm1289 = vweird.f32 %v1284
        %v1290 = vsel %vm1289, %v1284, %v1288
        %v1291 = vmul.f32 %v1283, %v1290
        %v1292 = vsub.f32 %v1279, %v1291
        %v1293 = vmul.f32 %v1292, %v1292
        %v1294 = vsel %vm865, %v1293, 0.0
        %1295 = vadd.xlane.f32.xlu0 %v1294
        %v1296 = vpop.xlane.xlu0 %1295
        %v1297 = vmul.f32 %v1296, %v1290
        %v1298 = vadd.f32 %v1297, 1e-05
        %v1299 = vrsqrt.pop %v1298
        %v1300 = vmul.f32 %v1299, %v1298
        %v1301 = vmul.f32 %v1300, %v1299
        %v1302 = vmul.f32 0.5, %v1301
        %v1303 = vsub.f32 1.5, %v1302
        %v1304 = vmul.f32 %v1299, %v1303
        %vm1305 = vweird.f32 %v1298
        %vm1306 = vweird.f32 %v1299
        %vm1307 = vmor %vm1305, %vm1306
        %v1308 = vsel %vm1307, %v1299, %v1304
        %v1309 = vmul.f32 %v1292, %v1308
        %v1310 = vperm.slane %v858, 1
        %v1311 = vmul.f32 %v1309, %v1310
        %v1312 = vperm.slane %v858, 2
        %v1313 = vadd.f32 %v1311, %v1312
        %v1314 = vadd.f32 %v856, %v1313
        %v1315 = vld [vmem:[%s674] sm:$0xff]
        %v1316 = vld [vmem:[%s674 + $0x8] sm:$0xff]
        %v1317 = vld [vmem:[%s674 + $0x10] sm:$0xff]
        %v1318 = vld [vmem:[%s674 + $0x18] sm:$0xff]
        %v1319 = vperm.slane %v857, 4
        %v1321 = vsel %vm865, %v1279, 0
        %1323 = vmatpush.msra.mxu0 0.0
        %1324 = vmatpush.msra.mxu0 0.0
        %1325 = vmatpush.msra.mxu0 0.0
        %1326 = vmatpush.msra.mxu0 0.0
        %1327 = vmatpush.msra.mxu0 0.0
        %1328 = vmatpush.msra.mxu0 0.0
        %1329 = vmatpush.msra.mxu0 0.0
        %1330 = vmatpush.msra.mxu0 0.0
        %1331 = vmatpush.msra.mxu0 0.0
        %1332 = vmatpush.msra.mxu0 0.0
        %1333 = vmatpush.msra.mxu0 0.0
        %1334 = vmatpush.msra.mxu0 0.0
        %1335 = vmatpush.msra.mxu0 %v1318
        %1336 = vmatpush.msra.mxu0 %v1317
        %1337 = vmatpush.msra.mxu0 %v1316
        %1338 = vmatpush.msra.mxu0 %v1315
        %1339 = vmatmul.f32.gmra.mxu0 %v1321
        %v1340 = vpop.f32.mrf.mxu0
        %v1341 = vadd.f32 %v1319, %v1340
        %1342 = vdwg.mxu0
        %v1343 = vld [vmem:[%s684] sm:$0xff]
        %v1344 = vld [vmem:[%s684 + $0x8] sm:$0xff]
        %v1345 = vld [vmem:[%s684 + $0x10] sm:$0xff]
        %v1346 = vld [vmem:[%s684 + $0x18] sm:$0xff]
        %v1347 = vperm.slane %v857, 5
        %v1349 = vsel %vm865, %v1314, 0
        %1351 = vmatpush.msra.mxu0 0.0
        %1352 = vmatpush.msra.mxu0 0.0
        %1353 = vmatpush.msra.mxu0 0.0
        %1354 = vmatpush.msra.mxu0 0.0
        %1355 = vmatpush.msra.mxu0 0.0
        %1356 = vmatpush.msra.mxu0 0.0
        %1357 = vmatpush.msra.mxu0 0.0
        %1358 = vmatpush.msra.mxu0 0.0
        %1359 = vmatpush.msra.mxu0 0.0
        %1360 = vmatpush.msra.mxu0 0.0
        %1361 = vmatpush.msra.mxu0 0.0
        %1362 = vmatpush.msra.mxu0 0.0
        %1363 = vmatpush.msra.mxu0 %v1346
        %1364 = vmatpush.msra.mxu0 %v1345
        %1365 = vmatpush.msra.mxu0 %v1344
        %1366 = vmatpush.msra.mxu0 %v1343
        %1367 = vmatmul.f32.gmra.mxu0 %v1349
        %v1368 = vpop.f32.mrf.mxu0
        %v1369 = vadd.f32 %v1347, %v1368
        %1370 = vdwg.mxu0
        %v1371 = vld [vmem:[%s694] sm:$0xff]
        %v1372 = vld [vmem:[%s694 + $0x8] sm:$0xff]
        %v1373 = vld [vmem:[%s694 + $0x10] sm:$0xff]
        %v1374 = vld [vmem:[%s694 + $0x18] sm:$0xff]
        %v1375 = vperm.slane %v857, 6
        %1376 = vmatpush.msra.mxu0 0.0
        %1377 = vmatpush.msra.mxu0 0.0
        %1378 = vmatpush.msra.mxu0 0.0
        %1379 = vmatpush.msra.mxu0 0.0
        %1380 = vmatpush.msra.mxu0 0.0
        %1381 = vmatpush.msra.mxu0 0.0
        %1382 = vmatpush.msra.mxu0 0.0
        %1383 = vmatpush.msra.mxu0 0.0
        %1384 = vmatpush.msra.mxu0 0.0
        %1385 = vmatpush.msra.mxu0 0.0
        %1386 = vmatpush.msra.mxu0 0.0
        %1387 = vmatpush.msra.mxu0 0.0
        %1388 = vmatpush.msra.mxu0 %v1374
        %1389 = vmatpush.msra.mxu0 %v1373
        %1390 = vmatpush.msra.mxu0 %v1372
        %1391 = vmatpush.msra.mxu0 %v1371
        %1392 = vmatmul.f32.gmra.mxu0 %v1349
        %v1393 = vpop.f32.mrf.mxu0
        %v1394 = vadd.f32 %v1375, %v1393
        %1395 = vdwg.mxu0
        %v1397 = vsel %vm939, %v1341, 0
        %v1400 = vsel %vm939, %v1369, 0
        %1402 = vmatpush.xpose.msra.mxu0 0.0
        %1403 = vmatpush.xpose.msra.mxu0 0.0
        %1404 = vmatpush.xpose.msra.mxu0 0.0
        %1405 = vmatpush.xpose.msra.mxu0 0.0
        %1406 = vmatpush.xpose.msra.mxu0 0.0
        %1407 = vmatpush.xpose.msra.mxu0 0.0
        %1408 = vmatpush.xpose.msra.mxu0 0.0
        %1409 = vmatpush.xpose.msra.mxu0 0.0
        %1410 = vmatpush.xpose.msra.mxu0 0.0
        %1411 = vmatpush.xpose.msra.mxu0 0.0
        %1412 = vmatpush.xpose.msra.mxu0 0.0
        %1413 = vmatpush.xpose.msra.mxu0 0.0
        %1414 = vmatpush.xpose.msra.mxu0 0.0
        %1415 = vmatpush.xpose.msra.mxu0 0.0
        %1416 = vmatpush.xpose.msra.mxu0 0.0
        %1417 = vmatpush.xpose.msra.mxu0 %v1400
        %1418 = vmatmul.f32.gmra.mxu0 %v1397
        %v1419 = vpop.f32.mrf.mxu0
        %v1420 = vadd.f32 0.0, %v1419
        %1421 = vdwg.mxu0
        %v1422 = vmul.f32 %v1420, 0.35355338
        %v1423 = vmul.f32 %v1422, 1.442695
        %v1424 = vpow.pop %v1423
        %v1425 = vsel %vm939, %v1424, 0.0
        %1426 = vadd.xlane.f32.xlu0 %v1425
        %v1427 = vpop.xlane.xlu0 %1426
        %v1428 = vrcp.pop %v1427
        %v1429 = vmul.f32 %v1427, %v1428
        %v1430 = vsub.f32 1.0, %v1429
        %v1431 = vmul.f32 %v1428, %v1430
        %v1432 = vadd.f32 %v1428, %v1431
        %vm1433 = vweird.f32 %v1427
        %vm1434 = vweird.f32 %v1428
        %vm1435 = vmor %vm1433, %vm1434
        %v1436 = vsel %vm1435, %v1428, %v1432
        %v1437 = vand.u32 2147483647, %v1427
        %vm1438 = vcmp.eq.f32.partialorder %v1437, 8.507059e+37
        %v1439 = vand.u32 %v1427, 2147483648
        %v1440 = vor.u32 1.1754944e-38, %v1439
        %v1441 = vsel %vm1438, %v1440, %v1436
        %v1442 = vmul.f32 %v1424, %v1441
        %v1444 = vsel %vm939, %v1442, 0
        %1446 = vmatpush.msra.mxu0 0.0
        %1447 = vmatpush.msra.mxu0 0.0
        %1448 = vmatpush.msra.mxu0 0.0
        %1449 = vmatpush.msra.mxu0 0.0
        %1450 = vmatpush.msra.mxu0 0.0
        %1451 = vmatpush.msra.mxu0 0.0
        %1452 = vmatpush.msra.mxu0 0.0
        %1453 = vmatpush.msra.mxu0 0.0
        %1454 = vmatpush.msra.mxu0 0.0
        %1455 = vmatpush.msra.mxu0 0.0
        %1456 = vmatpush.msra.mxu0 0.0
        %1457 = vmatpush.msra.mxu0 0.0
        %1458 = vmatpush.msra.mxu0 0.0
        %1459 = vmatpush.msra.mxu0 0.0
        %1460 = vmatpush.msra.mxu0 0.0
        %1461 = vmatpush.msra.mxu0 %v1394
        %1462 = vmatmul.f32.gmra.mxu0 %v1444
        %v1463 = vpop.f32.mrf.mxu0
        %v1464 = vadd.f32 0.0, %v1463
        %1465 = vdwg.mxu0
        %1466 = vrot.lane.b32.xlu0 %v1341, 120
        %v1467 = vpop.permute.xlu0 %1466
        %1468 = vrot.lane.b32.xlu0 %v1369, 120
        %v1469 = vpop.permute.xlu0 %1468
        %v1470 = vsel %vm939, %v1467, 0
        %v1472 = vsel %vm939, %v1469, 0
        %1474 = vmatpush.xpose.msra.mxu0 0.0
        %1475 = vmatpush.xpose.msra.mxu0 0.0
        %1476 = vmatpush.xpose.msra.mxu0 0.0
        %1477 = vmatpush.xpose.msra.mxu0 0.0
        %1478 = vmatpush.xpose.msra.mxu0 0.0
        %1479 = vmatpush.xpose.msra.mxu0 0.0
        %1480 = vmatpush.xpose.msra.mxu0 0.0
        %1481 = vmatpush.xpose.msra.mxu0 0.0
        %1482 = vmatpush.xpose.msra.mxu0 0.0
        %1483 = vmatpush.xpose.msra.mxu0 0.0
        %1484 = vmatpush.xpose.msra.mxu0 0.0
        %1485 = vmatpush.xpose.msra.mxu0 0.0
        %1486 = vmatpush.xpose.msra.mxu0 0.0
        %1487 = vmatpush.xpose.msra.mxu0 0.0
        %1488 = vmatpush.xpose.msra.mxu0 0.0
        %1489 = vmatpush.xpose.msra.mxu0 %v1472
        %1490 = vmatmul.f32.gmra.mxu0 %v1470
        %v1491 = vpop.f32.mrf.mxu0
        %v1492 = vadd.f32 0.0, %v1491
        %1493 = vdwg.mxu0
        %v1494 = vmul.f32 %v1492, 0.35355338
        %v1495 = vmul.f32 %v1494, 1.442695
        %v1496 = vpow.pop %v1495
        %v1497 = vsel %vm939, %v1496, 0.0
        %1498 = vadd.xlane.f32.xlu0 %v1497
        %v1499 = vpop.xlane.xlu0 %1498
        %v1500 = vrcp.pop %v1499
        %v1501 = vmul.f32 %v1499, %v1500
        %v1502 = vsub.f32 1.0, %v1501
        %v1503 = vmul.f32 %v1500, %v1502
        %v1504 = vadd.f32 %v1500, %v1503
        %vm1505 = vweird.f32 %v1499
        %vm1506 = vweird.f32 %v1500
        %vm1507 = vmor %vm1505, %vm1506
        %v1508 = vsel %vm1507, %v1500, %v1504
        %v1509 = vand.u32 2147483647, %v1499
        %vm1510 = vcmp.eq.f32.partialorder %v1509, 8.507059e+37
        %v1511 = vand.u32 %v1499, 2147483648
        %v1512 = vor.u32 1.1754944e-38, %v1511
        %v1513 = vsel %vm1510, %v1512, %v1508
        %v1514 = vmul.f32 %v1496, %v1513
        %1516 = vrot.lane.b32.xlu0 %v1394, 120
        %v1517 = vpop.permute.xlu0 %1516
        %v1520 = vsel %vm939, %v1514, 0
        %1522 = vmatpush.msra.mxu0 0.0
        %1523 = vmatpush.msra.mxu0 0.0
        %1524 = vmatpush.msra.mxu0 0.0
        %1525 = vmatpush.msra.mxu0 0.0
        %1526 = vmatpush.msra.mxu0 0.0
        %1527 = vmatpush.msra.mxu0 0.0
        %1528 = vmatpush.msra.mxu0 0.0
        %1529 = vmatpush.msra.mxu0 0.0
        %1530 = vmatpush.msra.mxu0 0.0
        %1531 = vmatpush.msra.mxu0 0.0
        %1532 = vmatpush.msra.mxu0 0.0
        %1533 = vmatpush.msra.mxu0 0.0
        %1534 = vmatpush.msra.mxu0 0.0
        %1535 = vmatpush.msra.mxu0 0.0
        %1536 = vmatpush.msra.mxu0 0.0
        %1537 = vmatpush.msra.mxu0 %v1517
        %1538 = vmatmul.f32.gmra.mxu0 %v1520
        %v1539 = vpop.f32.mrf.mxu0
        %v1540 = vadd.f32 0.0, %v1539
        %1541 = vdwg.mxu0
        %1542 = vrot.lane.b32.xlu0 %v1341, 112
        %v1543 = vpop.permute.xlu0 %1542
        %1544 = vrot.lane.b32.xlu0 %v1369, 112
        %v1545 = vpop.permute.xlu0 %1544
        %v1546 = vsel %vm939, %v1543, 0
        %v1548 = vsel %vm939, %v1545, 0
        %1550 = vmatpush.xpose.msra.mxu0 0.0
        %1551 = vmatpush.xpose.msra.mxu0 0.0
        %1552 = vmatpush.xpose.msra.mxu0 0.0
        %1553 = vmatpush.xpose.msra.mxu0 0.0
        %1554 = vmatpush.xpose.msra.mxu0 0.0
        %1555 = vmatpush.xpose.msra.mxu0 0.0
        %1556 = vmatpush.xpose.msra.mxu0 0.0
        %1557 = vmatpush.xpose.msra.mxu0 0.0
        %1558 = vmatpush.xpose.msra.mxu0 0.0
        %1559 = vmatpush.xpose.msra.mxu0 0.0
        %1560 = vmatpush.xpose.msra.mxu0 0.0
        %1561 = vmatpush.xpose.msra.mxu0 0.0
        %1562 = vmatpush.xpose.msra.mxu0 0.0
        %1563 = vmatpush.xpose.msra.mxu0 0.0
        %1564 = vmatpush.xpose.msra.mxu0 0.0
        %1565 = vmatpush.xpose.msra.mxu0 %v1548
        %1566 = vmatmul.f32.gmra.mxu0 %v1546
        %v1567 = vpop.f32.mrf.mxu0
        %v1568 = vadd.f32 0.0, %v1567
        %1569 = vdwg.mxu0
        %v1570 = vmul.f32 %v1568, 0.35355338
        %v1571 = vmul.f32 %v1570, 1.442695
        %v1572 = vpow.pop %v1571
        %v1573 = vsel %vm939, %v1572, 0.0
        %1574 = vadd.xlane.f32.xlu0 %v1573
        %v1575 = vpop.xlane.xlu0 %1574
        %v1576 = vrcp.pop %v1575
        %v1577 = vmul.f32 %v1575, %v1576
        %v1578 = vsub.f32 1.0, %v1577
        %v1579 = vmul.f32 %v1576, %v1578
        %v1580 = vadd.f32 %v1576, %v1579
        %vm1581 = vweird.f32 %v1575
        %vm1582 = vweird.f32 %v1576
        %vm1583 = vmor %vm1581, %vm1582
        %v1584 = vsel %vm1583, %v1576, %v1580
        %v1585 = vand.u32 2147483647, %v1575
        %vm1586 = vcmp.eq.f32.partialorder %v1585, 8.507059e+37
        %v1587 = vand.u32 %v1575, 2147483648
        %v1588 = vor.u32 1.1754944e-38, %v1587
        %v1589 = vsel %vm1586, %v1588, %v1584
        %v1590 = vmul.f32 %v1572, %v1589
        %1591 = vrot.lane.b32.xlu0 %v1394, 112
        %v1592 = vpop.permute.xlu0 %1591
        %v1595 = vsel %vm939, %v1590, 0
        %1597 = vmatpush.msra.mxu0 0.0
        %1598 = vmatpush.msra.mxu0 0.0
        %1599 = vmatpush.msra.mxu0 0.0
        %1600 = vmatpush.msra.mxu0 0.0
        %1601 = vmatpush.msra.mxu0 0.0
        %1602 = vmatpush.msra.mxu0 0.0
        %1603 = vmatpush.msra.mxu0 0.0
        %1604 = vmatpush.msra.mxu0 0.0
        %1605 = vmatpush.msra.mxu0 0.0
        %1606 = vmatpush.msra.mxu0 0.0
        %1607 = vmatpush.msra.mxu0 0.0
        %1608 = vmatpush.msra.mxu0 0.0
        %1609 = vmatpush.msra.mxu0 0.0
        %1610 = vmatpush.msra.mxu0 0.0
        %1611 = vmatpush.msra.mxu0 0.0
        %1612 = vmatpush.msra.mxu0 %v1592
        %1613 = vmatmul.f32.gmra.mxu0 %v1595
        %v1614 = vpop.f32.mrf.mxu0
        %v1615 = vadd.f32 0.0, %v1614
        %1616 = vdwg.mxu0
        %1617 = vrot.lane.b32.xlu0 %v1341, 104
        %v1618 = vpop.permute.xlu0 %1617
        %1619 = vrot.lane.b32.xlu0 %v1369, 104
        %v1620 = vpop.permute.xlu0 %1619
        %v1621 = vsel %vm939, %v1618, 0
        %v1623 = vsel %vm939, %v1620, 0
        %1625 = vmatpush.xpose.msra.mxu0 0.0
        %1626 = vmatpush.xpose.msra.mxu0 0.0
        %1627 = vmatpush.xpose.msra.mxu0 0.0
        %1628 = vmatpush.xpose.msra.mxu0 0.0
        %1629 = vmatpush.xpose.msra.mxu0 0.0
        %1630 = vmatpush.xpose.msra.mxu0 0.0
        %1631 = vmatpush.xpose.msra.mxu0 0.0
        %1632 = vmatpush.xpose.msra.mxu0 0.0
        %1633 = vmatpush.xpose.msra.mxu0 0.0
        %1634 = vmatpush.xpose.msra.mxu0 0.0
        %1635 = vmatpush.xpose.msra.mxu0 0.0
        %1636 = vmatpush.xpose.msra.mxu0 0.0
        %1637 = vmatpush.xpose.msra.mxu0 0.0
        %1638 = vmatpush.xpose.msra.mxu0 0.0
        %1639 = vmatpush.xpose.msra.mxu0 0.0
        %1640 = vmatpush.xpose.msra.mxu0 %v1623
        %1641 = vmatmul.f32.gmra.mxu0 %v1621
        %v1642 = vpop.f32.mrf.mxu0
        %v1643 = vadd.f32 0.0, %v1642
        %1644 = vdwg.mxu0
        %v1645 = vmul.f32 %v1643, 0.35355338
        %v1646 = vmul.f32 %v1645, 1.442695
        %v1647 = vpow.pop %v1646
        %v1648 = vsel %vm939, %v1647, 0.0
        %1649 = vadd.xlane.f32.xlu0 %v1648
        %v1650 = vpop.xlane.xlu0 %1649
        %v1651 = vrcp.pop %v1650
        %v1652 = vmul.f32 %v1650, %v1651
        %v1653 = vsub.f32 1.0, %v1652
        %v1654 = vmul.f32 %v1651, %v1653
        %v1655 = vadd.f32 %v1651, %v1654
        %vm1656 = vweird.f32 %v1650
        %vm1657 = vweird.f32 %v1651
        %vm1658 = vmor %vm1656, %vm1657
        %v1659 = vsel %vm1658, %v1651, %v1655
        %v1660 = vand.u32 2147483647, %v1650
        %vm1661 = vcmp.eq.f32.partialorder %v1660, 8.507059e+37
        %v1662 = vand.u32 %v1650, 2147483648
        %v1663 = vor.u32 1.1754944e-38, %v1662
        %v1664 = vsel %vm1661, %v1663, %v1659
        %v1665 = vmul.f32 %v1647, %v1664
        %1666 = vrot.lane.b32.xlu0 %v1394, 104
        %v1667 = vpop.permute.xlu0 %1666
        %v1670 = vsel %vm939, %v1665, 0
        %1672 = vmatpush.msra.mxu0 0.0
        %1673 = vmatpush.msra.mxu0 0.0
        %1674 = vmatpush.msra.mxu0 0.0
        %1675 = vmatpush.msra.mxu0 0.0
        %1676 = vmatpush.msra.mxu0 0.0
        %1677 = vmatpush.msra.mxu0 0.0
        %1678 = vmatpush.msra.mxu0 0.0
        %1679 = vmatpush.msra.mxu0 0.0
        %1680 = vmatpush.msra.mxu0 0.0
        %1681 = vmatpush.msra.mxu0 0.0
        %1682 = vmatpush.msra.mxu0 0.0
        %1683 = vmatpush.msra.mxu0 0.0
        %1684 = vmatpush.msra.mxu0 0.0
        %1685 = vmatpush.msra.mxu0 0.0
        %1686 = vmatpush.msra.mxu0 0.0
        %1687 = vmatpush.msra.mxu0 %v1667
        %1688 = vmatmul.f32.gmra.mxu0 %v1670
        %v1689 = vpop.f32.mrf.mxu0
        %v1690 = vadd.f32 0.0, %v1689
        %1691 = vdwg.mxu0
        %1693 = vrot.lane.b32.xlu0 %v1540, 8
        %v1694 = vpop.permute.xlu0 %1693
        %1697 = vrot.lane.b32.xlu0 %v1615, 16
        %v1698 = vpop.permute.xlu0 %1697
        %1701 = vrot.lane.b32.xlu0 %v1690, 24
        %v1702 = vpop.permute.xlu0 %1701
        %v1704 = vsel %vm939, %v1464, %v1694
        %v1705 = vsel %vm1249, %v1704, %v1698
        %v1706 = vsel %vm1251, %v1705, %v1702
        %v1707 = vld [vmem:[%s704] sm:$0xff]
        %v1708 = vld [vmem:[%s704 + $0x8] sm:$0xff]
        %v1709 = vld [vmem:[%s704 + $0x10] sm:$0xff]
        %v1710 = vld [vmem:[%s704 + $0x18] sm:$0xff]
        %v1711 = vperm.slane %v857, 7
        %v1713 = vsel %vm865, %v1706, 0
        %1715 = vmatpush.msra.mxu0 0.0
        %1716 = vmatpush.msra.mxu0 0.0
        %1717 = vmatpush.msra.mxu0 0.0
        %1718 = vmatpush.msra.mxu0 0.0
        %1719 = vmatpush.msra.mxu0 0.0
        %1720 = vmatpush.msra.mxu0 0.0
        %1721 = vmatpush.msra.mxu0 0.0
        %1722 = vmatpush.msra.mxu0 0.0
        %1723 = vmatpush.msra.mxu0 0.0
        %1724 = vmatpush.msra.mxu0 0.0
        %1725 = vmatpush.msra.mxu0 0.0
        %1726 = vmatpush.msra.mxu0 0.0
        %1727 = vmatpush.msra.mxu0 %v1710
        %1728 = vmatpush.msra.mxu0 %v1709
        %1729 = vmatpush.msra.mxu0 %v1708
        %1730 = vmatpush.msra.mxu0 %v1707
        %1731 = vmatmul.f32.gmra.mxu0 %v1713
        %v1732 = vpop.f32.mrf.mxu0
        %v1733 = vadd.f32 %v1711, %v1732
        %1734 = vdwg.mxu0
        %v1735 = vsel %vm865, %v1733, 0.0
        %1736 = vadd.xlane.f32.xlu0 %v1735
        %v1737 = vpop.xlane.xlu0 %1736
        %v1738 = vmul.f32 %v1737, %v1290
        %v1739 = vsub.f32 %v1733, %v1738
        %v1740 = vmul.f32 %v1739, %v1739
        %v1741 = vsel %vm865, %v1740, 0.0
        %1742 = vadd.xlane.f32.xlu0 %v1741
        %v1743 = vpop.xlane.xlu0 %1742
        %v1744 = vmul.f32 %v1743, %v1290
        %v1745 = vadd.f32 %v1744, 1e-05
        %v1746 = vrsqrt.pop %v1745
        %v1747 = vmul.f32 %v1746, %v1745
        %v1748 = vmul.f32 %v1747, %v1746
        %v1749 = vmul.f32 0.5, %v1748
        %v1750 = vsub.f32 1.5, %v1749
        %v1751 = vmul.f32 %v1746, %v1750
        %vm1752 = vweird.f32 %v1745
        %vm1753 = vweird.f32 %v1746
        %vm1754 = vmor %vm1752, %vm1753
        %v1755 = vsel %vm1754, %v1746, %v1751
        %v1756 = vmul.f32 %v1739, %v1755
        %v1757 = vperm.slane %v858, 3
        %v1758 = vmul.f32 %v1756, %v1757
        %v1759 = vperm.slane %v858, 4
        %v1760 = vadd.f32 %v1758, %v1759
        %v1761 = vadd.f32 %v1314, %v1760
        %v1762 = vld [vmem:[%s714] sm:$0xff]
        %v1763 = vld [vmem:[%s714 + $0x8] sm:$0xff]
        %v1764 = vld [vmem:[%s714 + $0x10] sm:$0xff]
        %v1765 = vld [vmem:[%s714 + $0x18] sm:$0xff]
        %v1767 = vperm.slane %v859, 0
        %v1770 = vsel %vm865, %v1761, 0
        %1772 = vmatpush.msra.mxu0 0.0
        %1773 = vmatpush.msra.mxu0 0.0
        %1774 = vmatpush.msra.mxu0 0.0
        %1775 = vmatpush.msra.mxu0 0.0
        %1776 = vmatpush.msra.mxu0 0.0
        %1777 = vmatpush.msra.mxu0 0.0
        %1778 = vmatpush.msra.mxu0 0.0
        %1779 = vmatpush.msra.mxu0 0.0
        %1780 = vmatpush.msra.mxu0 0.0
        %1781 = vmatpush.msra.mxu0 0.0
        %1782 = vmatpush.msra.mxu0 0.0
        %1783 = vmatpush.msra.mxu0 0.0
        %1784 = vmatpush.msra.mxu0 %v1765
        %1785 = vmatpush.msra.mxu0 %v1764
        %1786 = vmatpush.msra.mxu0 %v1763
        %1787 = vmatpush.msra.mxu0 %v1762
        %1788 = vmatmul.f32.gmra.mxu0 %v1770
        %v1789 = vpop.f32.mrf.mxu0
        %v1790 = vadd.f32 %v1767, %v1789
        %1791 = vdwg.mxu0
        %v1792 = vmax.f32 %v1790, 0.0
        %v1793 = vld [vmem:[%s845] sm:$0xff]
        %v1794 = vld [vmem:[%s845 + $0x8] sm:$0xff]
        %v1795 = vld [vmem:[%s845 + $0x10] sm:$0xff]
        %v1796 = vld [vmem:[%s845 + $0x18] sm:$0xff]
        %v1797 = vld [vmem:[%s845 + $0x20] sm:$0xff]
        %v1798 = vld [vmem:[%s845 + $0x28] sm:$0xff]
        %v1799 = vld [vmem:[%s845 + $0x30] sm:$0xff]
        %v1800 = vld [vmem:[%s845 + $0x38] sm:$0xff]
        %v1801 = vperm.slane %v858, 0
        %vm1802 = vcmask 523264
        %v1804 = vsel %vm1802, %v1792, 0
        %1806 = vmatpush.msra.mxu0 0.0
        %1807 = vmatpush.msra.mxu0 0.0
        %1808 = vmatpush.msra.mxu0 0.0
        %1809 = vmatpush.msra.mxu0 0.0
        %1810 = vmatpush.msra.mxu0 0.0
        %1811 = vmatpush.msra.mxu0 0.0
        %1812 = vmatpush.msra.mxu0 0.0
        %1813 = vmatpush.msra.mxu0 0.0
        %1814 = vmatpush.msra.mxu0 %v1800
        %1815 = vmatpush.msra.mxu0 %v1799
        %1816 = vmatpush.msra.mxu0 %v1798
        %1817 = vmatpush.msra.mxu0 %v1797
        %1818 = vmatpush.msra.mxu0 %v1796
        %1819 = vmatpush.msra.mxu0 %v1795
        %1820 = vmatpush.msra.mxu0 %v1794
        %1821 = vmatpush.msra.mxu0 %v1793
        %1822 = vmatmul.f32.gmra.mxu0 %v1804
        %v1823 = vpop.f32.mrf.mxu0
        %v1824 = vadd.f32 %v1801, %v1823
        %1825 = vdwg.mxu0
        %v1826 = vsel %vm865, %v1824, 0.0
        %1827 = vadd.xlane.f32.xlu0 %v1826
        %v1828 = vpop.xlane.xlu0 %1827
        %v1829 = vmul.f32 %v1828, %v1290
        %v1830 = vsub.f32 %v1824, %v1829
        %v1831 = vmul.f32 %v1830, %v1830
        %v1832 = vsel %vm865, %v1831, 0.0
        %1833 = vadd.xlane.f32.xlu0 %v1832
        %v1834 = vpop.xlane.xlu0 %1833
        %v1835 = vmul.f32 %v1834, %v1290
        %v1836 = vadd.f32 %v1835, 1e-05
        %v1837 = vrsqrt.pop %v1836
        %v1838 = vmul.f32 %v1837, %v1836
        %v1839 = vmul.f32 %v1838, %v1837
        %v1840 = vmul.f32 0.5, %v1839
        %v1841 = vsub.f32 1.5, %v1840
        %v1842 = vmul.f32 %v1837, %v1841
        %vm1843 = vweird.f32 %v1836
        %vm1844 = vweird.f32 %v1837
        %vm1845 = vmor %vm1843, %vm1844
        %v1846 = vsel %vm1845, %v1837, %v1842
        %v1847 = vmul.f32 %v1830, %v1846
        %v1848 = vperm.slane %v858, 5
        %v1849 = vmul.f32 %v1847, %v1848
        %v1850 = vperm.slane %v858, 6
        %v1851 = vadd.f32 %v1849, %v1850
        %v1852 = vadd.f32 %v1761, %v1851
        %1853 = vst.msk [vmem:[%s825] sm:$0xff] %vm865, %v1852
        %s1854 = sand.u32 %s400, 1
        %s1855 = scalar_lea.sflag [#allocation4], %s1854
        %s1856 = sand.u32 %s400, 1
        %s1857 = smul.addr %s1856, 8
        %s1858 = scalar_lea.vmem [#allocation16], %s1857
        // Predicated region
        $region109: #{tpu_custom_call.1} parent=71 // pred_check
          %p1859 = pneg %p410
        $region110: #{tpu_custom_call.1} parent=71 // pred_check_branch
          %1861 = sbr.rel (%p1859) target = $region112
        $region111: #{tpu_custom_call.1} parent=71 // pred_region
          %1863 = vsyncadd %s1855, 0
          %s1864 = smul.addr %s46, 8
          %s1865 = scalar_lea.hbm %s13, %s1864
          %s1867 = sshll.u32 %s1858, 4
          %s1868 = int_to_ptr.vmem [resolvable:$true] %s1867
          %s1869 = sshll.u32 %s1865, 4
          %s1870 = int_to_ptr.hbm [resolvable:$true] %s1869
          %1872 = dma.vmem_to_hbm [thread:$0]  %s1868, 128, %s1870, %s1855
        $region112: #{tpu_custom_call.1} parent=71 // pred_fallthru
          _
      $region72: #{tpu_custom_call.1} parent=5 // pred_fallthru
        _
      %p1873 = scmp.le.s32.totalorder 2, %s37
      // Predicated region
      $region113: #{tpu_custom_call.1} parent=5 // pred_check
        %p1874 = pneg %p1873
      $region114: #{tpu_custom_call.1} parent=5 // pred_check_branch
        %1876 = sbr.rel (%p1874) target = $region116
      $region115: #{tpu_custom_call.1} parent=5 // pred_region
        %s1877 = ssub.s32 %s37, 2
        // Predicated region
        $region117: #{tpu_custom_call.1} parent=115 // pred_check
          %p1878 = pneg %p416
        $region118: #{tpu_custom_call.1} parent=115 // pred_check_branch
          %1880 = sbr.rel (%p1878) target = $region120
        $region119: #{tpu_custom_call.1} parent=115 // pred_region
          %s1881 = sand.u32 %s401, 1
          %s1882 = scalar_lea.sflag [#allocation4], %s1881
          %s1883 = sand.u32 %s401, 1
          %s1884 = smul.addr %s1883, 8
          %s1885 = scalar_lea.vmem [#allocation16], %s1884
          %1887 = dma.done %s1882, 128
        $region120: #{tpu_custom_call.1} parent=115 // pred_fallthru
          _
      $region116: #{tpu_custom_call.1} parent=5 // pred_fallthru
        _
    $region6: #{tpu_custom_call.1} parent=1 // loop_footer
      %s41 = sadd.s32 1, %s37
    $region7: #{tpu_custom_call.1} parent=1 // loop_footer_branch
      %36 = sbr.rel target = $region3
    $region8: #{tpu_custom_call.1} parent=1 // loop_exit
      _
    %1888 = vsyncpa [#allocation3], 1
    %s1889 = scalar_lea.sflag [#allocation3], 1
    %1890 = vsyncpa %s1889, 1
    %1891 = vsyncpa [#allocation6], 1
    %s1892 = scalar_lea.sflag [#allocation6], 1
    %1893 = vsyncpa %s1892, 1
    %1894 = vsyncpa [#allocation9], 1
    %s1895 = scalar_lea.sflag [#allocation9], 1
    %1896 = vsyncpa %s1895, 1
    %1897 = vsyncpa [#allocation12], 1
    %s1898 = scalar_lea.sflag [#allocation12], 1
    %1899 = vsyncpa %s1898, 1
    %1900 = vsyncpa [#allocation15], 1
    %s1901 = scalar_lea.sflag [#allocation15], 1
    %1902 = vsyncpa %s1901, 1
    %1903 = vsyncpa [#allocation4], 1
    %s1904 = scalar_lea.sflag [#allocation4], 1
    %1905 = vsyncpa %s1904, 1

</llo_original>
